<compile_context>
chip_gen: v7x
topology: tpu7x:2x2x1
jax: 0.10.0
libtpu: 0.0.40
codegen_flags: <defaults>
</compile_context>

<pallas_src>
import functools

import jax
import jax.numpy as jnp
from jax import lax
from jax.experimental import pallas as pl
from jax.experimental.pallas import tpu as pltpu


def _cross_attn_kernel(h_ref, kv_ref, mask_ref, lnw_ref, wq_ref, wkv_ref, wo_ref,
                       o_ref, q_s, kv_s, ctx_s,
                       *, num_heads, dim_head, eps, mask_value):
    f32, bf16 = jnp.float32, jnp.bfloat16
    hdh = num_heads * dim_head

    h = h_ref[0]                      # (TQ, D) f32 — residual source / layernorm input
    kv = kv_ref[0]                    # (Sk, D) bf16
    mask = mask_ref[0] > 0.0          # (TQ, Sk) bool (1.0 = attend)
    lnw = lnw_ref[...]                # (1, D) f32

    # ---- RMS layernorm (model_center LayerNorm with bias=False: no mean subtraction) ----
    var = jnp.mean(h * h, axis=-1, keepdims=True)
    xn = (h * lax.rsqrt(var + eps) * lnw).astype(bf16)                  # (TQ, D)

    # ---- full-width projections (pre-transposed bf16 weights, f32 MXU accumulation) ----
    q_s[...] = jnp.dot(xn, wq_ref[...],
                       preferred_element_type=f32).astype(bf16)         # (TQ, H*Dh)
    kv_s[...] = jnp.dot(kv, wkv_ref[...],
                        preferred_element_type=f32).astype(bf16)        # (Sk, 2*H*Dh)

    # ---- per-head attention; output projection is deferred & fused after the loop ----
    nt_dims = (((1,), (1,)), ((), ()))        # contract last dims: q @ k^T without .T
    for hh in range(num_heads):               # static loop; slices come from VMEM scratch
        lo = hh * dim_head
        qh = q_s[:, lo:lo + dim_head]                     # (TQ, Dh) bf16
        kh = kv_s[:, lo:lo + dim_head]                    # (Sk, Dh) bf16
        vh = kv_s[:, hdh + lo:hdh + lo + dim_head]        # (Sk, Dh) bf16

        s = lax.dot_general(qh, kh, nt_dims,
                            preferred_element_type=f32)   # (TQ, Sk); attn_scale=False
        s = jnp.where(mask, s, mask_value)                # finite sentinel, no NaN
        m = jnp.max(s, axis=-1, keepdims=True)
        p = jnp.exp(s - m)
        p = p * pl.reciprocal(jnp.sum(p, axis=-1, keepdims=True), approx=True)
        p = jnp.where(mask, p, 0.0)                       # post-softmax re-zero (module)

        ctx_s[:, lo:lo + dim_head] = jnp.dot(p.astype(bf16), vh,
                                             preferred_element_type=f32)

    # ---- ONE full-width output projection over all heads + residual add ----
    att = jnp.dot(ctx_s[...].astype(bf16), wo_ref[...], preferred_element_type=f32)
    o_ref[0] = (h + att).astype(o_ref.dtype)


def cross_attention_block(hidden_states, key_value_states, attention_mask,
                          ln_weight, wq, wk, wv, wo,
                          *, num_heads, dim_head, eps=1e-5,
                          mask_value=-1e30, q_block=256):
    """hidden_states (B, Sq, D); key_value_states (B, Sk, D); attention_mask (B, Sq, Sk)."""
    B, Sq, D = hidden_states.shape
    _, Sk, _ = key_value_states.shape
    hdh = num_heads * dim_head

    # Host-side prep: pre-transposed bf16 weights (no in-kernel .T), fused K|V weight,
    # bf16 key/value + mask streams (half the HBM bytes), f32 residual path.
    wq_t = wq.T.astype(jnp.bfloat16)                                     # (D, H*Dh)
    wkv_t = jnp.concatenate([wk.T, wv.T], axis=1).astype(jnp.bfloat16)   # (D, 2*H*Dh)
    wo_t = wo.T.astype(jnp.bfloat16)                                     # (H*Dh, D)
    kv_bf16 = key_value_states.astype(jnp.bfloat16)
    mask_bf16 = attention_mask.astype(jnp.bfloat16)
    lnw_2d = ln_weight.reshape(1, D).astype(jnp.float32)
    h_f32 = hidden_states.astype(jnp.float32)

    # Query tiling (bounds VMEM to O(TQ*Sk), adds parallel grid units for megacore/v7x).
    # NOTE: for lane-dense stores, D and H*Dh should ideally be multiples of 128.
    tq = q_block if (Sq % q_block == 0) else Sq
    n_q = Sq // tq

    kernel = functools.partial(_cross_attn_kernel, num_heads=num_heads,
                               dim_head=dim_head, eps=eps, mask_value=mask_value)

    flops = 2 * B * (Sq * D * hdh                         # Q projection
                     + n_q * Sk * D * 2 * hdh             # fused K|V projection (per q-tile)
                     + 2 * num_heads * Sq * Sk * dim_head  # scores + context
                     + Sq * hdh * D)                      # output projection
    bytes_accessed = (h_f32.size * 4 + B * Sq * D * 4      # hidden in + out (f32)
                      + n_q * kv_bf16.size * 2 + mask_bf16.size * 2
                      + B * n_q * (wq_t.size + wkv_t.size + wo_t.size) * 2)
    cost = pl.CostEstimate(flops=flops,
                           transcendentals=B * num_heads * Sq * (Sk + 1),
                           bytes_accessed=bytes_accessed)

    out = pl.pallas_call(
        kernel,
        out_shape=jax.ShapeDtypeStruct((B, Sq, D), jnp.float32),
        grid=(B, n_q),
        in_specs=[
            pl.BlockSpec((1, tq, D), lambda b, qi: (b, qi, 0)),    # hidden_states (f32)
            pl.BlockSpec((1, Sk, D), lambda b, qi: (b, 0, 0)),     # key_value_states (bf16)
            pl.BlockSpec((1, tq, Sk), lambda b, qi: (b, qi, 0)),   # attention_mask (bf16)
            pl.BlockSpec((1, D), lambda b, qi: (0, 0)),            # layernorm weight
            pl.BlockSpec((D, hdh), lambda b, qi: (0, 0)),          # Wq^T
            pl.BlockSpec((D, 2 * hdh), lambda b, qi: (0, 0)),      # [Wk | Wv]^T
            pl.BlockSpec((hdh, D), lambda b, qi: (0, 0)),          # Wo^T
        ],
        out_specs=pl.BlockSpec((1, tq, D), lambda b, qi: (b, qi, 0)),
        scratch_shapes=[
            pltpu.VMEM((tq, hdh), jnp.bfloat16),       # q (all heads)
            pltpu.VMEM((Sk, 2 * hdh), jnp.bfloat16),   # k | v (all heads)
            pltpu.VMEM((tq, hdh), jnp.float32),        # per-head context accumulator
        ],
        compiler_params=pltpu.CompilerParams(
            dimension_semantics=("parallel", "parallel"),
            vmem_limit_bytes=32 * 1024 * 1024),
        cost_estimate=cost,
    )(h_f32, kv_bf16, mask_bf16, lnw_2d, wq_t, wkv_t, wo_t)

    return out.astype(hidden_states.dtype)


def _reference(hidden, kv, mask, ln_w, wq, wk, wv, wo, *, num_heads, dim_head, eps=1e-5):
    """Pure-JAX f32 reference mirroring the PyTorch forward."""
    B, Sq, D = hidden.shape
    Sk = kv.shape[1]
    var = jnp.mean(hidden * hidden, axis=-1, keepdims=True)
    x = hidden * lax.rsqrt(var + eps) * ln_w
    q = (x @ wq.T).reshape(B, Sq, num_heads, dim_head).transpose(0, 2, 1, 3)
    k = (kv @ wk.T).reshape(B, Sk, num_heads, dim_head).transpose(0, 2, 1, 3)
    v = (kv @ wv.T).reshape(B, Sk, num_heads, dim_head).transpose(0, 2, 1, 3)
    score = jnp.einsum("bhqd,bhkd->bhqk", q, k)
    m = (mask > 0.0)[:, None, :, :]
    score = jnp.where(m, score, -jnp.inf)
    prob = jax.nn.softmax(score, axis=-1)
    prob = jnp.where(m, prob, 0.0)
    ctx = jnp.einsum("bhqk,bhkd->bhqd", prob, v)
    ctx = ctx.transpose(0, 2, 1, 3).reshape(B, Sq, num_heads * dim_head)
    return hidden + ctx @ wo.T


if __name__ == "__main__":
    # Small shapes consistent with the module's forward signature.
    B, Sq, Sk = 2, 8, 16
    dim_model, num_heads, dim_head = 32, 4, 8
    att_init_std = 0.02
    norm_init_var = 1.0

    key = jax.random.PRNGKey(0)
    k_h, k_kv, k_m, k_q, k_k, k_v, k_o = jax.random.split(key, 7)

    hidden = jax.random.normal(k_h, (B, Sq, dim_model), jnp.float32)
    key_value = jax.random.normal(k_kv, (B, Sk, dim_model), jnp.float32)
    mask = (jax.random.uniform(k_m, (B, Sq, Sk)) > 0.3).astype(jnp.float32)
    mask = mask.at[:, :, 0].set(1.0)  # at least one valid key per query row

    # Deterministic parameter init (module __init__ shapes; init_std=0.02, init_mean=0.0).
    ln_weight = jnp.full((dim_model,), norm_init_var, jnp.float32)
    wq = att_init_std * jax.random.normal(k_q, (num_heads * dim_head, dim_model), jnp.float32)
    wk = att_init_std * jax.random.normal(k_k, (num_heads * dim_head, dim_model), jnp.float32)
    wv = att_init_std * jax.random.normal(k_v, (num_heads * dim_head, dim_model), jnp.float32)
    wo = att_init_std * jax.random.normal(k_o, (dim_model, num_heads * dim_head), jnp.float32)

    out = cross_attention_block(hidden, key_value, mask, ln_weight, wq, wk, wv, wo,
                                num_heads=num_heads, dim_head=dim_head)
    out = jax.block_until_ready(out)

    ref = _reference(hidden, key_value, mask, ln_weight, wq, wk, wv, wo,
                     num_heads=num_heads, dim_head=dim_head)
    assert out.shape == (B, Sq, dim_model)
    # bf16 matmul operands (f32 accumulation) vs f32 reference -> loose-ish tolerance.
    assert jnp.allclose(out, ref, atol=5e-3, rtol=5e-3), "mismatch vs JAX reference"

    print("KERNEL_OK")
</pallas_src>

<mosaic_0001>
module attributes {stable_mosaic.version = 11 : i64} {
  func.func @_cross_attn_kernel(%arg0: i32, %arg1: i32, %arg2: memref<1x8x32xf32, #tpu.memory_space<vmem>>, %arg3: memref<1x16x32xbf16, #tpu.memory_space<vmem>>, %arg4: memref<1x8x16xbf16, #tpu.memory_space<vmem>>, %arg5: memref<1x32xf32, #tpu.memory_space<vmem>>, %arg6: memref<32x32xbf16, #tpu.memory_space<vmem>>, %arg7: memref<32x64xbf16, #tpu.memory_space<vmem>>, %arg8: memref<32x32xbf16, #tpu.memory_space<vmem>>, %arg9: memref<1x8x32xf32, #tpu.memory_space<vmem>>, %arg10: memref<8x32xbf16, #tpu.memory_space<vmem>>, %arg11: memref<16x64xbf16, #tpu.memory_space<vmem>>, %arg12: memref<8x32xf32, #tpu.memory_space<vmem>>) attributes {dimension_semantics = [#tpu.dimension_semantics<parallel>, #tpu.dimension_semantics<parallel>], iteration_bounds = array<i64: 2, 1>, scalar_prefetch = 0 : i64, scratch_operands = 3 : i64, tpu.core_type = #tpu.core_type<tc>, window_params = [{transform_indices = @transform_0, window_bounds = array<i64: 1, 8, 32>}, {transform_indices = @transform_1, window_bounds = array<i64: 1, 16, 32>}, {transform_indices = @transform_2, window_bounds = array<i64: 1, 8, 16>}, {pipeline_mode = #tpu.pipeline_mode<synchronous>, transform_indices = @transform_3, window_bounds = array<i64: 1, 32>}, {pipeline_mode = #tpu.pipeline_mode<synchronous>, transform_indices = @transform_4, window_bounds = array<i64: 32, 32>}, {pipeline_mode = #tpu.pipeline_mode<synchronous>, transform_indices = @transform_5, window_bounds = array<i64: 32, 64>}, {pipeline_mode = #tpu.pipeline_mode<synchronous>, transform_indices = @transform_6, window_bounds = array<i64: 32, 32>}, {transform_indices = @transform_7, window_bounds = array<i64: 1, 8, 32>}]} {
    %c0 = arith.constant 0 : index
    %c0_0 = arith.constant 0 : index
    %c0_1 = arith.constant 0 : index
    %0 = vector.load %arg2[%c0, %c0_0, %c0_1] : memref<1x8x32xf32, #tpu.memory_space<vmem>>, vector<1x8x32xf32>
    %1 = vector.shape_cast %0 : vector<1x8x32xf32> to vector<8x32xf32>
    %c0_2 = arith.constant 0 : index
    %c0_3 = arith.constant 0 : index
    %c0_4 = arith.constant 0 : index
    %2 = vector.load %arg3[%c0_2, %c0_3, %c0_4] : memref<1x16x32xbf16, #tpu.memory_space<vmem>>, vector<1x16x32xbf16>
    %3 = vector.shape_cast %2 : vector<1x16x32xbf16> to vector<16x32xbf16>
    %c0_5 = arith.constant 0 : index
    %c0_6 = arith.constant 0 : index
    %c0_7 = arith.constant 0 : index
    %4 = vector.load %arg4[%c0_5, %c0_6, %c0_7] : memref<1x8x16xbf16, #tpu.memory_space<vmem>>, vector<1x8x16xbf16>
    %5 = vector.shape_cast %4 : vector<1x8x16xbf16> to vector<8x16xbf16>
    %cst = arith.constant 0.000000e+00 : bf16
    %6 = vector.broadcast %cst : bf16 to vector<8x16xbf16>
    %7 = arith.cmpf ogt, %5, %6 : vector<8x16xbf16>
    %c0_8 = arith.constant 0 : index
    %c0_9 = arith.constant 0 : index
    %8 = vector.load %arg5[%c0_8, %c0_9] : memref<1x32xf32, #tpu.memory_space<vmem>>, vector<1x32xf32>
    %9 = arith.mulf %1, %1 : vector<8x32xf32>
    %cst_10 = arith.constant dense<0.000000e+00> : vector<8xf32>
    %10 = vector.multi_reduction <add>, %9, %cst_10 [1] : vector<8x32xf32> to vector<8xf32>
    %11 = vector.shape_cast %10 : vector<8xf32> to vector<8x1xf32>
    %cst_11 = arith.constant 3.200000e+01 : f32
    %12 = vector.broadcast %cst_11 : f32 to vector<8x1xf32>
    %13 = arith.divf %11, %12 : vector<8x1xf32>
    %cst_12 = arith.constant 9.99999974E-6 : f32
    %14 = vector.broadcast %cst_12 : f32 to vector<8x1xf32>
    %15 = arith.addf %13, %14 : vector<8x1xf32>
    %16 = math.rsqrt %15 : vector<8x1xf32>
    %17 = vector.broadcast %16 : vector<8x1xf32> to vector<8x32xf32>
    %18 = arith.mulf %1, %17 : vector<8x32xf32>
    %19 = vector.broadcast %8 : vector<1x32xf32> to vector<8x32xf32>
    %20 = arith.mulf %18, %19 : vector<8x32xf32>
    %21 = arith.truncf %20 : vector<8x32xf32> to vector<8x32xbf16>
    %c0_13 = arith.constant 0 : index
    %c0_14 = arith.constant 0 : index
    %22 = vector.load %arg6[%c0_13, %c0_14] : memref<32x32xbf16, #tpu.memory_space<vmem>>, vector<32x32xbf16>
    %cst_15 = arith.constant dense<0.000000e+00> : vector<8x32xf32>
    %23 = tpu.matmul %21, %22, %cst_15 {dimension_numbers = #tpu.dot_dimension_numbers<[1], [0], [0], [1], [0, 0, 1, 1], [], []>} : vector<8x32xbf16>, vector<32x32xbf16>, vector<8x32xf32> -> vector<8x32xf32>
    %24 = arith.truncf %23 : vector<8x32xf32> to vector<8x32xbf16>
    %c0_16 = arith.constant 0 : index
    %c0_17 = arith.constant 0 : index
    %25 = vector.load %arg10[%c0_16, %c0_17] : memref<8x32xbf16, #tpu.memory_space<vmem>>, vector<8x32xbf16>
    tpu.vector_store %arg10[%c0_16, %c0_17], %24 {strides = array<i32>} : memref<8x32xbf16, #tpu.memory_space<vmem>>, vector<8x32xbf16>,
    %c0_18 = arith.constant 0 : index
    %c0_19 = arith.constant 0 : index
    %26 = vector.load %arg7[%c0_18, %c0_19] : memref<32x64xbf16, #tpu.memory_space<vmem>>, vector<32x64xbf16>
    %cst_20 = arith.constant dense<0.000000e+00> : vector<16x64xf32>
    %27 = tpu.matmul %3, %26, %cst_20 {dimension_numbers = #tpu.dot_dimension_numbers<[1], [0], [0], [1], [0, 0, 1, 1], [], []>} : vector<16x32xbf16>, vector<32x64xbf16>, vector<16x64xf32> -> vector<16x64xf32>
    %28 = arith.truncf %27 : vector<16x64xf32> to vector<16x64xbf16>
    %c0_21 = arith.constant 0 : index
    %c0_22 = arith.constant 0 : index
    %29 = vector.load %arg11[%c0_21, %c0_22] : memref<16x64xbf16, #tpu.memory_space<vmem>>, vector<16x64xbf16>
    tpu.vector_store %arg11[%c0_21, %c0_22], %28 {strides = array<i32>} : memref<16x64xbf16, #tpu.memory_space<vmem>>, vector<16x64xbf16>,
    %c0_23 = arith.constant 0 : index
    %c0_24 = arith.constant 0 : index
    %30 = vector.load %arg10[%c0_23, %c0_24] : memref<8x32xbf16, #tpu.memory_space<vmem>>, vector<8x8xbf16>
    %c0_25 = arith.constant 0 : index
    %c0_26 = arith.constant 0 : index
    %31 = vector.load %arg11[%c0_25, %c0_26] : memref<16x64xbf16, #tpu.memory_space<vmem>>, vector<16x8xbf16>
    %c0_27 = arith.constant 0 : index
    %c32 = arith.constant 32 : index
    %32 = vector.load %arg11[%c0_27, %c32] : memref<16x64xbf16, #tpu.memory_space<vmem>>, vector<16x8xbf16>
    %cst_28 = arith.constant dense<0.000000e+00> : vector<8x16xf32>
    %33 = tpu.matmul %30, %31, %cst_28 {dimension_numbers = #tpu.dot_dimension_numbers<[1], [1], [0], [0], [0, 0, 1, 0], [], []>} : vector<8x8xbf16>, vector<16x8xbf16>, vector<8x16xf32> -> vector<8x16xf32>
    %cst_29 = arith.constant -1.000000e+30 : f32
    %34 = vector.broadcast %cst_29 : f32 to vector<8x16xf32>
    %35 = arith.select %7, %33, %34 : vector<8x16xi1>, vector<8x16xf32>
    %cst_30 = arith.constant dense<0xFF800000> : vector<8xf32>
    %36 = vector.multi_reduction <maximumf>, %35, %cst_30 [1] : vector<8x16xf32> to vector<8xf32>
    %37 = vector.shape_cast %36 : vector<8xf32> to vector<8x1xf32>
    %38 = vector.broadcast %37 : vector<8x1xf32> to vector<8x16xf32>
    %39 = arith.subf %35, %38 : vector<8x16xf32>
    %40 = math.exp %39 : vector<8x16xf32>
    %cst_31 = arith.constant dense<0.000000e+00> : vector<8xf32>
    %41 = vector.multi_reduction <add>, %40, %cst_31 [1] : vector<8x16xf32> to vector<8xf32>
    %42 = vector.shape_cast %41 : vector<8xf32> to vector<8x1xf32>
    %43 = tpu.reciprocal %42 {approx = true} : vector<8x1xf32> -> vector<8x1xf32>
    %44 = vector.broadcast %43 : vector<8x1xf32> to vector<8x16xf32>
    %45 = arith.mulf %40, %44 : vector<8x16xf32>
    %cst_32 = arith.constant 0.000000e+00 : f32
    %46 = vector.broadcast %cst_32 : f32 to vector<8x16xf32>
    %47 = arith.select %7, %45, %46 : vector<8x16xi1>, vector<8x16xf32>
    %48 = arith.truncf %47 : vector<8x16xf32> to vector<8x16xbf16>
    %cst_33 = arith.constant dense<0.000000e+00> : vector<8x8xf32>
    %49 = tpu.matmul %48, %32, %cst_33 {dimension_numbers = #tpu.dot_dimension_numbers<[1], [0], [0], [1], [0, 0, 1, 1], [], []>} : vector<8x16xbf16>, vector<16x8xbf16>, vector<8x8xf32> -> vector<8x8xf32>
    %c0_34 = arith.constant 0 : index
    %c0_35 = arith.constant 0 : index
    %50 = vector.load %arg12[%c0_34, %c0_35] : memref<8x32xf32, #tpu.memory_space<vmem>>, vector<8x8xf32>
    tpu.vector_store %arg12[%c0_34, %c0_35], %49 {strides = array<i32>} : memref<8x32xf32, #tpu.memory_space<vmem>>, vector<8x8xf32>,
    %c0_36 = arith.constant 0 : index
    %c8 = arith.constant 8 : index
    %51 = vector.load %arg10[%c0_36, %c8] : memref<8x32xbf16, #tpu.memory_space<vmem>>, vector<8x8xbf16>
    %c0_37 = arith.constant 0 : index
    %c8_38 = arith.constant 8 : index
    %52 = vector.load %arg11[%c0_37, %c8_38] : memref<16x64xbf16, #tpu.memory_space<vmem>>, vector<16x8xbf16>
    %c0_39 = arith.constant 0 : index
    %c40 = arith.constant 40 : index
    %53 = vector.load %arg11[%c0_39, %c40] : memref<16x64xbf16, #tpu.memory_space<vmem>>, vector<16x8xbf16>
    %cst_40 = arith.constant dense<0.000000e+00> : vector<8x16xf32>
    %54 = tpu.matmul %51, %52, %cst_40 {dimension_numbers = #tpu.dot_dimension_numbers<[1], [1], [0], [0], [0, 0, 1, 0], [], []>} : vector<8x8xbf16>, vector<16x8xbf16>, vector<8x16xf32> -> vector<8x16xf32>
    %cst_41 = arith.constant -1.000000e+30 : f32
    %55 = vector.broadcast %cst_41 : f32 to vector<8x16xf32>
    %56 = arith.select %7, %54, %55 : vector<8x16xi1>, vector<8x16xf32>
    %cst_42 = arith.constant dense<0xFF800000> : vector<8xf32>
    %57 = vector.multi_reduction <maximumf>, %56, %cst_42 [1] : vector<8x16xf32> to vector<8xf32>
    %58 = vector.shape_cast %57 : vector<8xf32> to vector<8x1xf32>
    %59 = vector.broadcast %58 : vector<8x1xf32> to vector<8x16xf32>
    %60 = arith.subf %56, %59 : vector<8x16xf32>
    %61 = math.exp %60 : vector<8x16xf32>
    %cst_43 = arith.constant dense<0.000000e+00> : vector<8xf32>
    %62 = vector.multi_reduction <add>, %61, %cst_43 [1] : vector<8x16xf32> to vector<8xf32>
    %63 = vector.shape_cast %62 : vector<8xf32> to vector<8x1xf32>
    %64 = tpu.reciprocal %63 {approx = true} : vector<8x1xf32> -> vector<8x1xf32>
    %65 = vector.broadcast %64 : vector<8x1xf32> to vector<8x16xf32>
    %66 = arith.mulf %61, %65 : vector<8x16xf32>
    %cst_44 = arith.constant 0.000000e+00 : f32
    %67 = vector.broadcast %cst_44 : f32 to vector<8x16xf32>
    %68 = arith.select %7, %66, %67 : vector<8x16xi1>, vector<8x16xf32>
    %69 = arith.truncf %68 : vector<8x16xf32> to vector<8x16xbf16>
    %cst_45 = arith.constant dense<0.000000e+00> : vector<8x8xf32>
    %70 = tpu.matmul %69, %53, %cst_45 {dimension_numbers = #tpu.dot_dimension_numbers<[1], [0], [0], [1], [0, 0, 1, 1], [], []>} : vector<8x16xbf16>, vector<16x8xbf16>, vector<8x8xf32> -> vector<8x8xf32>
    %c0_46 = arith.constant 0 : index
    %c8_47 = arith.constant 8 : index
    %71 = vector.load %arg12[%c0_46, %c8_47] : memref<8x32xf32, #tpu.memory_space<vmem>>, vector<8x8xf32>
    tpu.vector_store %arg12[%c0_46, %c8_47], %70 {strides = array<i32>} : memref<8x32xf32, #tpu.memory_space<vmem>>, vector<8x8xf32>,
    %c0_48 = arith.constant 0 : index
    %c16 = arith.constant 16 : index
    %72 = vector.load %arg10[%c0_48, %c16] : memref<8x32xbf16, #tpu.memory_space<vmem>>, vector<8x8xbf16>
    %c0_49 = arith.constant 0 : index
    %c16_50 = arith.constant 16 : index
    %73 = vector.load %arg11[%c0_49, %c16_50] : memref<16x64xbf16, #tpu.memory_space<vmem>>, vector<16x8xbf16>
    %c0_51 = arith.constant 0 : index
    %c48 = arith.constant 48 : index
    %74 = vector.load %arg11[%c0_51, %c48] : memref<16x64xbf16, #tpu.memory_space<vmem>>, vector<16x8xbf16>
    %cst_52 = arith.constant dense<0.000000e+00> : vector<8x16xf32>
    %75 = tpu.matmul %72, %73, %cst_52 {dimension_numbers = #tpu.dot_dimension_numbers<[1], [1], [0], [0], [0, 0, 1, 0], [], []>} : vector<8x8xbf16>, vector<16x8xbf16>, vector<8x16xf32> -> vector<8x16xf32>
    %cst_53 = arith.constant -1.000000e+30 : f32
    %76 = vector.broadcast %cst_53 : f32 to vector<8x16xf32>
    %77 = arith.select %7, %75, %76 : vector<8x16xi1>, vector<8x16xf32>
    %cst_54 = arith.constant dense<0xFF800000> : vector<8xf32>
    %78 = vector.multi_reduction <maximumf>, %77, %cst_54 [1] : vector<8x16xf32> to vector<8xf32>
    %79 = vector.shape_cast %78 : vector<8xf32> to vector<8x1xf32>
    %80 = vector.broadcast %79 : vector<8x1xf32> to vector<8x16xf32>
    %81 = arith.subf %77, %80 : vector<8x16xf32>
    %82 = math.exp %81 : vector<8x16xf32>
    %cst_55 = arith.constant dense<0.000000e+00> : vector<8xf32>
    %83 = vector.multi_reduction <add>, %82, %cst_55 [1] : vector<8x16xf32> to vector<8xf32>
    %84 = vector.shape_cast %83 : vector<8xf32> to vector<8x1xf32>
    %85 = tpu.reciprocal %84 {approx = true} : vector<8x1xf32> -> vector<8x1xf32>
    %86 = vector.broadcast %85 : vector<8x1xf32> to vector<8x16xf32>
    %87 = arith.mulf %82, %86 : vector<8x16xf32>
    %cst_56 = arith.constant 0.000000e+00 : f32
    %88 = vector.broadcast %cst_56 : f32 to vector<8x16xf32>
    %89 = arith.select %7, %87, %88 : vector<8x16xi1>, vector<8x16xf32>
    %90 = arith.truncf %89 : vector<8x16xf32> to vector<8x16xbf16>
    %cst_57 = arith.constant dense<0.000000e+00> : vector<8x8xf32>
    %91 = tpu.matmul %90, %74, %cst_57 {dimension_numbers = #tpu.dot_dimension_numbers<[1], [0], [0], [1], [0, 0, 1, 1], [], []>} : vector<8x16xbf16>, vector<16x8xbf16>, vector<8x8xf32> -> vector<8x8xf32>
    %c0_58 = arith.constant 0 : index
    %c16_59 = arith.constant 16 : index
    %92 = vector.load %arg12[%c0_58, %c16_59] : memref<8x32xf32, #tpu.memory_space<vmem>>, vector<8x8xf32>
    tpu.vector_store %arg12[%c0_58, %c16_59], %91 {strides = array<i32>} : memref<8x32xf32, #tpu.memory_space<vmem>>, vector<8x8xf32>,
    %c0_60 = arith.constant 0 : index
    %c24 = arith.constant 24 : index
    %93 = vector.load %arg10[%c0_60, %c24] : memref<8x32xbf16, #tpu.memory_space<vmem>>, vector<8x8xbf16>
    %c0_61 = arith.constant 0 : index
    %c24_62 = arith.constant 24 : index
    %94 = vector.load %arg11[%c0_61, %c24_62] : memref<16x64xbf16, #tpu.memory_space<vmem>>, vector<16x8xbf16>
    %c0_63 = arith.constant 0 : index
    %c56 = arith.constant 56 : index
    %95 = vector.load %arg11[%c0_63, %c56] : memref<16x64xbf16, #tpu.memory_space<vmem>>, vector<16x8xbf16>
    %cst_64 = arith.constant dense<0.000000e+00> : vector<8x16xf32>
    %96 = tpu.matmul %93, %94, %cst_64 {dimension_numbers = #tpu.dot_dimension_numbers<[1], [1], [0], [0], [0, 0, 1, 0], [], []>} : vector<8x8xbf16>, vector<16x8xbf16>, vector<8x16xf32> -> vector<8x16xf32>
    %cst_65 = arith.constant -1.000000e+30 : f32
    %97 = vector.broadcast %cst_65 : f32 to vector<8x16xf32>
    %98 = arith.select %7, %96, %97 : vector<8x16xi1>, vector<8x16xf32>
    %cst_66 = arith.constant dense<0xFF800000> : vector<8xf32>
    %99 = vector.multi_reduction <maximumf>, %98, %cst_66 [1] : vector<8x16xf32> to vector<8xf32>
    %100 = vector.shape_cast %99 : vector<8xf32> to vector<8x1xf32>
    %101 = vector.broadcast %100 : vector<8x1xf32> to vector<8x16xf32>
    %102 = arith.subf %98, %101 : vector<8x16xf32>
    %103 = math.exp %102 : vector<8x16xf32>
    %cst_67 = arith.constant dense<0.000000e+00> : vector<8xf32>
    %104 = vector.multi_reduction <add>, %103, %cst_67 [1] : vector<8x16xf32> to vector<8xf32>
    %105 = vector.shape_cast %104 : vector<8xf32> to vector<8x1xf32>
    %106 = tpu.reciprocal %105 {approx = true} : vector<8x1xf32> -> vector<8x1xf32>
    %107 = vector.broadcast %106 : vector<8x1xf32> to vector<8x16xf32>
    %108 = arith.mulf %103, %107 : vector<8x16xf32>
    %cst_68 = arith.constant 0.000000e+00 : f32
    %109 = vector.broadcast %cst_68 : f32 to vector<8x16xf32>
    %110 = arith.select %7, %108, %109 : vector<8x16xi1>, vector<8x16xf32>
    %111 = arith.truncf %110 : vector<8x16xf32> to vector<8x16xbf16>
    %cst_69 = arith.constant dense<0.000000e+00> : vector<8x8xf32>
    %112 = tpu.matmul %111, %95, %cst_69 {dimension_numbers = #tpu.dot_dimension_numbers<[1], [0], [0], [1], [0, 0, 1, 1], [], []>} : vector<8x16xbf16>, vector<16x8xbf16>, vector<8x8xf32> -> vector<8x8xf32>
    %c0_70 = arith.constant 0 : index
    %c24_71 = arith.constant 24 : index
    %113 = vector.load %arg12[%c0_70, %c24_71] : memref<8x32xf32, #tpu.memory_space<vmem>>, vector<8x8xf32>
    tpu.vector_store %arg12[%c0_70, %c24_71], %112 {strides = array<i32>} : memref<8x32xf32, #tpu.memory_space<vmem>>, vector<8x8xf32>,
    %c0_72 = arith.constant 0 : index
    %c0_73 = arith.constant 0 : index
    %114 = vector.load %arg12[%c0_72, %c0_73] : memref<8x32xf32, #tpu.memory_space<vmem>>, vector<8x32xf32>
    %115 = arith.truncf %114 : vector<8x32xf32> to vector<8x32xbf16>
    %c0_74 = arith.constant 0 : index
    %c0_75 = arith.constant 0 : index
    %116 = vector.load %arg8[%c0_74, %c0_75] : memref<32x32xbf16, #tpu.memory_space<vmem>>, vector<32x32xbf16>
    %cst_76 = arith.constant dense<0.000000e+00> : vector<8x32xf32>
    %117 = tpu.matmul %115, %116, %cst_76 {dimension_numbers = #tpu.dot_dimension_numbers<[1], [0], [0], [1], [0, 0, 1, 1], [], []>} : vector<8x32xbf16>, vector<32x32xbf16>, vector<8x32xf32> -> vector<8x32xf32>
    %118 = arith.addf %1, %117 : vector<8x32xf32>
    %c0_77 = arith.constant 0 : index
    %c0_78 = arith.constant 0 : index
    %c0_79 = arith.constant 0 : index
    %119 = vector.load %arg9[%c0_77, %c0_78, %c0_79] : memref<1x8x32xf32, #tpu.memory_space<vmem>>, vector<1x8x32xf32>
    %120 = vector.shape_cast %119 : vector<1x8x32xf32> to vector<8x32xf32>
    %121 = vector.shape_cast %118 : vector<8x32xf32> to vector<1x8x32xf32>
    tpu.vector_store %arg9[%c0_77, %c0_78, %c0_79], %121 {strides = array<i32>} : memref<1x8x32xf32, #tpu.memory_space<vmem>>, vector<1x8x32xf32>,
    return
  }
  func.func @transform_0(%arg0: i32, %arg1: i32) -> (i32, i32, i32) {
    %c0_i32 = arith.constant 0 : i32
    %c0_i32_0 = arith.constant 0 : i32
    return %arg0, %arg1, %c0_i32 : i32, i32, i32
  }
  func.func @transform_1(%arg0: i32, %arg1: i32) -> (i32, i32, i32) {
    %c0_i32 = arith.constant 0 : i32
    %c0_i32_0 = arith.constant 0 : i32
    %c0_i32_1 = arith.constant 0 : i32
    return %arg0, %c0_i32, %c0_i32_0 : i32, i32, i32
  }
  func.func @transform_2(%arg0: i32, %arg1: i32) -> (i32, i32, i32) {
    %c0_i32 = arith.constant 0 : i32
    %c0_i32_0 = arith.constant 0 : i32
    return %arg0, %arg1, %c0_i32 : i32, i32, i32
  }
  func.func @transform_3(%arg0: i32, %arg1: i32) -> (i32, i32) {
    %c0_i32 = arith.constant 0 : i32
    %c0_i32_0 = arith.constant 0 : i32
    %c0_i32_1 = arith.constant 0 : i32
    return %c0_i32, %c0_i32_0 : i32, i32
  }
  func.func @transform_4(%arg0: i32, %arg1: i32) -> (i32, i32) {
    %c0_i32 = arith.constant 0 : i32
    %c0_i32_0 = arith.constant 0 : i32
    %c0_i32_1 = arith.constant 0 : i32
    return %c0_i32, %c0_i32_0 : i32, i32
  }
  func.func @transform_5(%arg0: i32, %arg1: i32) -> (i32, i32) {
    %c0_i32 = arith.constant 0 : i32
    %c0_i32_0 = arith.constant 0 : i32
    %c0_i32_1 = arith.constant 0 : i32
    return %c0_i32, %c0_i32_0 : i32, i32
  }
  func.func @transform_6(%arg0: i32, %arg1: i32) -> (i32, i32) {
    %c0_i32 = arith.constant 0 : i32
    %c0_i32_0 = arith.constant 0 : i32
    %c0_i32_1 = arith.constant 0 : i32
    return %c0_i32, %c0_i32_0 : i32, i32
  }
  func.func @transform_7(%arg0: i32, %arg1: i32) -> (i32, i32, i32) {
    %c0_i32 = arith.constant 0 : i32
    %c0_i32_0 = arith.constant 0 : i32
    return %arg0, %arg1, %c0_i32 : i32, i32, i32
  }
}

</mosaic_0001>

<llo_original>
// kernel: tpu_custom_call.1
$region0: #{tpu_custom_call.1}
  #allocation0 [shape = 'u32[]', space=smem, size = 0x4, offset = 0x4, fixed_abs, tag = 'smem constant byte address 0x4 - core index']
  #allocation1 [shape = 'u32[144,128]{1,0:T(1,128)}', space=vmem, size = 0x12000, scoped, tag = 'internal scratch']
  #allocation2 [shape = 'bf16[8,32]{1,0:T(8,128)(2,1)}', space=vmem, size = 0x800, scoped, tag = 'scratch operand']
  #allocation3 [shape = 'bf16[16,64]{1,0:T(16,128)(2,1)}', space=vmem, size = 0x1000, scoped, tag = 'scratch operand']
  #allocation4 [shape = 'f32[8,32]{1,0:T(8,128)}', space=vmem, size = 0x1000, scoped, tag = 'scratch operand']
  %s0 = inlined_call_operand.hbm [shape: f32[2,8,32], index: 0, kind: input, shape index: {}]
  %s1 = inlined_call_operand.hbm [shape: bf16[2,16,32], index: 1, kind: input, shape index: {}]
  %s2 = inlined_call_operand.hbm [shape: bf16[2,8,16], index: 2, kind: input, shape index: {}]
  %s3 = inlined_call_operand.vmem [shape: f32[1,32], index: 3, kind: input, shape index: {}]
  %s4 = inlined_call_operand.hbm [shape: bf16[32,32], index: 4, kind: input, shape index: {}]
  %s5 = inlined_call_operand.vmem [shape: bf16[32,64], index: 5, kind: input, shape index: {}]
  %s6 = inlined_call_operand.hbm [shape: bf16[32,32], index: 6, kind: input, shape index: {}]
  %s7 = inlined_call_operand.hbm [shape: f32[2,8,32], index: 7, kind: output, shape index: {}]
  %s8 = sld [smem:[#allocation0]]
  $region81: #{tpu_custom_call.1} parent=0
    _
  %s10 = ssub.s32 1, %s8
  %s11 = scalar_select 0, %s10, %s8
  $region1: #{tpu_custom_call.1} parent=0
    #allocation5 [shape = 'u8[8192]{0}', space=vmem, size = 0x2000, scoped, tag = 'input window, operand 0']
    #allocation6 [shape = 's32[2]{0}', space=sflag, size = 0x8, scoped, tag = 'scoped memory for tpu_custom_call.1']
    #allocation7 [shape = 's32[2]{0}', space=sflag, size = 0x8, scoped, tag = 'scoped memory for tpu_custom_call.1']
    #allocation8 [shape = 'u8[8192]{0}', space=vmem, size = 0x2000, scoped, tag = 'input window, operand 1']
    #allocation9 [shape = 's32[2]{0}', space=sflag, size = 0x8, scoped, tag = 'scoped memory for tpu_custom_call.1']
    #allocation10 [shape = 'u8[4096]{0}', space=vmem, size = 0x1000, scoped, tag = 'input window, operand 2']
    #allocation11 [shape = 'u8[8192]{0}', space=vmem, size = 0x2000, scoped, tag = 'input window, operand 4, single buffered']
    #allocation12 [shape = 's32[1]{0}', space=sflag, size = 0x4, scoped, tag = 'scoped memory for tpu_custom_call.1']
    #allocation13 [shape = 'u8[8192]{0}', space=vmem, size = 0x2000, scoped, tag = 'input window, operand 6, single buffered']
    #allocation14 [shape = 'u8[8192]{0}', space=vmem, size = 0x2000, scoped, tag = 'output window, operand 0']
    %12 = vsyncpa [#allocation6], 0
    %s13 = scalar_lea.sflag [#allocation6], 1
    %14 = vsyncpa %s13, 0
    %15 = vsyncpa [#allocation9], 0
    %s16 = scalar_lea.sflag [#allocation9], 1
    %17 = vsyncpa %s16, 0
    %18 = vsyncpa [#allocation12], 0
    %19 = vsyncpa [#allocation7], 0
    %s20 = scalar_lea.sflag [#allocation7], 1
    %21 = vsyncpa %s20, 0
    loop: start=0, step=1, limit=4
    $region2: #{tpu_custom_call.1} parent=1 // loop_pre_header
      _
    $region3: #{tpu_custom_call.1} parent=1 // loop_header
      %s23 = sphi 0, %s27
      %p24 = scmp.ge.s32.totalorder %s23, 4
      %s30 = sphi 0, %s42
      %s31 = sphi 0, %s38
      %s32 = sphi 0, %s30
      %s33 = sphi 0, %s31
      %s34 = sphi 0, %s32
      %s35 = sphi 0, %s33
      %s47 = sphi 0, %s49
      %s50 = sphi 0, %s47
      %s51 = sphi 0, %s50
      %s67 = sphi 0, %s51
      %s73 = sphi 0, %s75
      %s76 = sphi 0, %s73
      %s77 = sphi 0, %s76
      %s93 = sphi 0, %s77
      %s101 = sphi 0, %s103
      %s104 = sphi 0, %s101
      %s105 = sphi 0, %s104
      %s121 = sphi 0, %s105
      %s125 = sphi 0, %s125
      %s127 = sphi 0, %s125
      %s128 = sphi 0, %s127
      %s142 = sphi 0, %s128
      %s146 = sphi 0, %s146
      %s148 = sphi 0, %s146
      %s149 = sphi 0, %s148
      %s163 = sphi 0, %s149
      %s167 = sphi 0, %s167
      %s169 = sphi 0, %s167
      %s170 = sphi 0, %s169
      %s184 = sphi 0, %s170
      %s188 = sphi 0, %s188
      %s190 = sphi 0, %s188
      %s191 = sphi 0, %s190
      %s205 = sphi 0, %s191
      %s213 = sphi 0, %s215
      %s216 = sphi 0, %s213
      %s217 = sphi 0, %s216
      %s233 = sphi 0, %s217
    $region4: #{tpu_custom_call.1} parent=1 // loop_header_branch
      %26 = sbr.rel (%p24) target = $region8
    $region5: #{tpu_custom_call.1} parent=1 // loop_body
      %s28 = ssub.s32 %s23, 1
      %s29 = ssub.s32 %s23, 2
      %s36 = sadd.s32 1, %s31
      %p37 = scmp.ge.s32.totalorder %s36, 1
      %s38 = scalar_select %p37, 0, %s36
      %s39 = sadd.s32 1, %s30
      %s40 = scalar_select %p37, %s39, %s30
      %p41 = scmp.ge.s32.totalorder %s40, 2
      %s42 = scalar_select %p41, 0, %s40
      %s43 = ssub.s32 %s30, %s42
      %s44 = ssub.s32 %s31, %s38
      %s45 = sor.u32 %s43, %s44
      %p46 = scmp.eq.s32.totalorder %s45, 0
      %s48 = sadd.s32 %s47, 1
      %s49 = scalar_select %p46, %s47, %s48
      %p52 = pneg %p46
      %p53 = scmp.eq.s32.totalorder %s23, 1
      %p54 = por %p52, %p53
      %p55 = scmp.ne.s32.totalorder %s47, %s50
      %p56 = scmp.eq.s32.totalorder %s23, 0
      %p57 = por %p55, %p56
      %p58 = scmp.ne.s32.totalorder %s47, %s50
      %p59 = scmp.eq.s32.totalorder %s28, 1
      %p60 = por %p58, %p59
      %p61 = scmp.ne.s32.totalorder %s50, %s51
      %p62 = scmp.eq.s32.totalorder %s28, 0
      %p63 = por %p61, %p62
      %p64 = scmp.ne.s32.totalorder %s50, %s51
      %p65 = scmp.eq.s32.totalorder %s29, 1
      %p66 = por %p64, %p65
      %p68 = scmp.ne.s32.totalorder %s51, %s67
      %p69 = scmp.eq.s32.totalorder %s29, 0
      %p70 = por %p68, %p69
      %s71 = ssub.s32 %s30, %s42
      %p72 = scmp.eq.s32.totalorder %s71, 0
      %s74 = sadd.s32 %s73, 1
      %s75 = scalar_select %p72, %s73, %s74
      %p78 = pneg %p72
      %p79 = scmp.eq.s32.totalorder %s23, 1
      %p80 = por %p78, %p79
      %p81 = scmp.ne.s32.totalorder %s73, %s76
      %p82 = scmp.eq.s32.totalorder %s23, 0
      %p83 = por %p81, %p82
      %p84 = scmp.ne.s32.totalorder %s73, %s76
      %p85 = scmp.eq.s32.totalorder %s28, 1
      %p86 = por %p84, %p85
      %p87 = scmp.ne.s32.totalorder %s76, %s77
      %p88 = scmp.eq.s32.totalorder %s28, 0
      %p89 = por %p87, %p88
      %p90 = scmp.ne.s32.totalorder %s76, %s77
      %p91 = scmp.eq.s32.totalorder %s29, 1
      %p92 = por %p90, %p91
      %p94 = scmp.ne.s32.totalorder %s77, %s93
      %p95 = scmp.eq.s32.totalorder %s29, 0
      %p96 = por %p94, %p95
      %s97 = ssub.s32 %s30, %s42
      %s98 = ssub.s32 %s31, %s38
      %s99 = sor.u32 %s97, %s98
      %p100 = scmp.eq.s32.totalorder %s99, 0
      %s102 = sadd.s32 %s101, 1
      %s103 = scalar_select %p100, %s101, %s102
      %p106 = pneg %p100
      %p107 = scmp.eq.s32.totalorder %s23, 1
      %p108 = por %p106, %p107
      %p109 = scmp.ne.s32.totalorder %s101, %s104
      %p110 = scmp.eq.s32.totalorder %s23, 0
      %p111 = por %p109, %p110
      %p112 = scmp.ne.s32.totalorder %s101, %s104
      %p113 = scmp.eq.s32.totalorder %s28, 1
      %p114 = por %p112, %p113
      %p115 = scmp.ne.s32.totalorder %s104, %s105
      %p116 = scmp.eq.s32.totalorder %s28, 0
      %p117 = por %p115, %p116
      %p118 = scmp.ne.s32.totalorder %s104, %s105
      %p119 = scmp.eq.s32.totalorder %s29, 1
      %p120 = por %p118, %p119
      %p122 = scmp.ne.s32.totalorder %s105, %s121
      %p123 = scmp.eq.s32.totalorder %s29, 0
      %p124 = por %p122, %p123
      %s126 = sadd.s32 %s125, 1
      %p129 = scmp.eq.s32.totalorder %s23, 1
      %p130 = scmp.ne.s32.totalorder %s125, %s127
      %p131 = scmp.eq.s32.totalorder %s23, 0
      %p132 = por %p130, %p131
      %p133 = scmp.ne.s32.totalorder %s125, %s127
      %p134 = scmp.eq.s32.totalorder %s28, 1
      %p135 = por %p133, %p134
      %p136 = scmp.ne.s32.totalorder %s127, %s128
      %p137 = scmp.eq.s32.totalorder %s28, 0
      %p138 = por %p136, %p137
      %p139 = scmp.ne.s32.totalorder %s127, %s128
      %p140 = scmp.eq.s32.totalorder %s29, 1
      %p141 = por %p139, %p140
      %p143 = scmp.ne.s32.totalorder %s128, %s142
      %p144 = scmp.eq.s32.totalorder %s29, 0
      %p145 = por %p143, %p144
      %s147 = sadd.s32 %s146, 1
      %p150 = scmp.eq.s32.totalorder %s23, 1
      %p151 = scmp.ne.s32.totalorder %s146, %s148
      %p152 = scmp.eq.s32.totalorder %s23, 0
      %p153 = por %p151, %p152
      %p154 = scmp.ne.s32.totalorder %s146, %s148
      %p155 = scmp.eq.s32.totalorder %s28, 1
      %p156 = por %p154, %p155
      %p157 = scmp.ne.s32.totalorder %s148, %s149
      %p158 = scmp.eq.s32.totalorder %s28, 0
      %p159 = por %p157, %p158
      %p160 = scmp.ne.s32.totalorder %s148, %s149
      %p161 = scmp.eq.s32.totalorder %s29, 1
      %p162 = por %p160, %p161
      %p164 = scmp.ne.s32.totalorder %s149, %s163
      %p165 = scmp.eq.s32.totalorder %s29, 0
      %p166 = por %p164, %p165
      %s168 = sadd.s32 %s167, 1
      %p171 = scmp.eq.s32.totalorder %s23, 1
      %p172 = scmp.ne.s32.totalorder %s167, %s169
      %p173 = scmp.eq.s32.totalorder %s23, 0
      %p174 = por %p172, %p173
      %p175 = scmp.ne.s32.totalorder %s167, %s169
      %p176 = scmp.eq.s32.totalorder %s28, 1
      %p177 = por %p175, %p176
      %p178 = scmp.ne.s32.totalorder %s169, %s170
      %p179 = scmp.eq.s32.totalorder %s28, 0
      %p180 = por %p178, %p179
      %p181 = scmp.ne.s32.totalorder %s169, %s170
      %p182 = scmp.eq.s32.totalorder %s29, 1
      %p183 = por %p181, %p182
      %p185 = scmp.ne.s32.totalorder %s170, %s184
      %p186 = scmp.eq.s32.totalorder %s29, 0
      %p187 = por %p185, %p186
      %s189 = sadd.s32 %s188, 1
      %p192 = scmp.eq.s32.totalorder %s23, 1
      %p193 = scmp.ne.s32.totalorder %s188, %s190
      %p194 = scmp.eq.s32.totalorder %s23, 0
      %p195 = por %p193, %p194
      %p196 = scmp.ne.s32.totalorder %s188, %s190
      %p197 = scmp.eq.s32.totalorder %s28, 1
      %p198 = por %p196, %p197
      %p199 = scmp.ne.s32.totalorder %s190, %s191
      %p200 = scmp.eq.s32.totalorder %s28, 0
      %p201 = por %p199, %p200
      %p202 = scmp.ne.s32.totalorder %s190, %s191
      %p203 = scmp.eq.s32.totalorder %s29, 1
      %p204 = por %p202, %p203
      %p206 = scmp.ne.s32.totalorder %s191, %s205
      %p207 = scmp.eq.s32.totalorder %s29, 0
      %p208 = por %p206, %p207
      %s209 = ssub.s32 %s30, %s42
      %s210 = ssub.s32 %s31, %s38
      %s211 = sor.u32 %s209, %s210
      %p212 = scmp.eq.s32.totalorder %s211, 0
      %s214 = sadd.s32 %s213, 1
      %s215 = scalar_select %p212, %s213, %s214
      %p218 = pneg %p212
      %p219 = scmp.eq.s32.totalorder %s23, 1
      %p220 = por %p218, %p219
      %p221 = scmp.ne.s32.totalorder %s213, %s216
      %p222 = scmp.eq.s32.totalorder %s23, 0
      %p223 = por %p221, %p222
      %p224 = scmp.ne.s32.totalorder %s213, %s216
      %p225 = scmp.eq.s32.totalorder %s28, 1
      %p226 = por %p224, %p225
      %p227 = scmp.ne.s32.totalorder %s216, %s217
      %p228 = scmp.eq.s32.totalorder %s28, 0
      %p229 = por %p227, %p228
      %p230 = scmp.ne.s32.totalorder %s216, %s217
      %p231 = scmp.eq.s32.totalorder %s29, 1
      %p232 = por %p230, %p231
      %p234 = scmp.ne.s32.totalorder %s217, %s233
      %p235 = scmp.eq.s32.totalorder %s29, 0
      %p236 = por %p234, %p235
      %p237 = scmp.le.s32.totalorder 1, %s23
      %p238 = scmp.lt.s32.totalorder %s23, 3
      %p239 = pnand %p237, %p238
      %p240 = pneg %p239
      // Predicated region
      $region9: #{tpu_custom_call.1} parent=5 // pred_check
        _
      $region10: #{tpu_custom_call.1} parent=5 // pred_check_branch
        %242 = sbr.rel (%p239) target = $region12
      $region11: #{tpu_custom_call.1} parent=5 // pred_region
        %s243 = ssub.s32 %s23, 1
        // Predicated region
        $region13: #{tpu_custom_call.1} parent=11 // pred_check
          %p244 = pneg %p138
        $region14: #{tpu_custom_call.1} parent=11 // pred_check_branch
          %246 = sbr.rel (%p244) target = $region16
        $region15: #{tpu_custom_call.1} parent=11 // pred_region
          _
        $region16: #{tpu_custom_call.1} parent=11 // pred_fallthru
          _
        // Predicated region
        $region17: #{tpu_custom_call.1} parent=11 // pred_check
          %p247 = pneg %p159
        $region18: #{tpu_custom_call.1} parent=11 // pred_check_branch
          %249 = sbr.rel (%p247) target = $region20
        $region19: #{tpu_custom_call.1} parent=11 // pred_region
          %s251 = ssub.s32 256, 256
          %252 = vsyncadd [#allocation12], %s251
          %s253 = sshll.u32 [#allocation11], 4
          %s254 = int_to_ptr.vmem [resolvable:$true] %s253
          %259 = dma.hbm_to_vmem [thread:$0]  %s4, 256, %s254, [#allocation12], 64, 64, 4
        $region20: #{tpu_custom_call.1} parent=11 // pred_fallthru
          _
        // Predicated region
        $region21: #{tpu_custom_call.1} parent=11 // pred_check
          %p260 = pneg %p180
        $region22: #{tpu_custom_call.1} parent=11 // pred_check_branch
          %262 = sbr.rel (%p260) target = $region24
        $region23: #{tpu_custom_call.1} parent=11 // pred_region
          _
        $region24: #{tpu_custom_call.1} parent=11 // pred_fallthru
          _
        // Predicated region
        $region25: #{tpu_custom_call.1} parent=11 // pred_check
          %p263 = pneg %p201
        $region26: #{tpu_custom_call.1} parent=11 // pred_check_branch
          %265 = sbr.rel (%p263) target = $region28
        $region27: #{tpu_custom_call.1} parent=11 // pred_region
          %s267 = ssub.s32 256, 256
          %268 = vsyncadd [#allocation12], %s267
          %s269 = sshll.u32 [#allocation13], 4
          %s270 = int_to_ptr.vmem [resolvable:$true] %s269
          %275 = dma.hbm_to_vmem [thread:$0]  %s6, 256, %s270, [#allocation12], 64, 64, 4
        $region28: #{tpu_custom_call.1} parent=11 // pred_fallthru
          _
      $region12: #{tpu_custom_call.1} parent=5 // pred_fallthru
        _
      %p276 = scmp.lt.s32.totalorder %s23, 2
      // Predicated region
      $region29: #{tpu_custom_call.1} parent=5 // pred_check
        %p277 = pneg %p276
      $region30: #{tpu_custom_call.1} parent=5 // pred_check_branch
        %279 = sbr.rel (%p277) target = $region32
      $region31: #{tpu_custom_call.1} parent=5 // pred_region
        // Predicated region
        $region33: #{tpu_custom_call.1} parent=31 // pred_check
          %p280 = pneg %p57
        $region34: #{tpu_custom_call.1} parent=31 // pred_check_branch
          %282 = sbr.rel (%p280) target = $region36
        $region35: #{tpu_custom_call.1} parent=31 // pred_region
          %s283 = sand.u32 %s47, 1
          %s284 = scalar_lea.sflag [#allocation6], %s283
          %s285 = sand.u32 %s47, 1
          %s286 = smul.addr %s285, 8
          %s287 = scalar_lea.vmem [#allocation5], %s286
          %s289 = ssub.s32 128, 128
          %290 = vsyncadd %s284, %s289
          %s291 = sadd.s32 %s31, %s30
          %s292 = smul.addr %s291, 128
          %s293 = scalar_lea.hbm %s0, %s292
          %s295 = sshll.u32 %s287, 4
          %s296 = int_to_ptr.vmem [resolvable:$true] %s295
          %298 = dma.hbm_to_vmem [thread:$0]  %s293, 128, %s296, %s284
        $region36: #{tpu_custom_call.1} parent=31 // pred_fallthru
          _
        // Predicated region
        $region37: #{tpu_custom_call.1} parent=31 // pred_check
          %p299 = pneg %p83
        $region38: #{tpu_custom_call.1} parent=31 // pred_check_branch
          %301 = sbr.rel (%p299) target = $region40
        $region39: #{tpu_custom_call.1} parent=31 // pred_region
          %s302 = sand.u32 %s23, 1
          %s303 = scalar_lea.sflag [#allocation9], %s302
          %s304 = sand.u32 %s73, 1
          %s305 = smul.addr %s304, 8
          %s306 = scalar_lea.vmem [#allocation8], %s305
          %s308 = ssub.s32 128, 128
          %309 = vsyncadd %s303, %s308
          %s310 = smul.addr %s30, 2
          %s311 = smul.addr %s310, 64
          %s312 = scalar_lea.hbm %s1, %s311
          %s313 = sshll.u32 %s306, 4
          %s314 = int_to_ptr.vmem [resolvable:$true] %s313
          %319 = dma.hbm_to_vmem [thread:$0]  %s312, 128, %s314, %s303, 64, 64, 4
        $region40: #{tpu_custom_call.1} parent=31 // pred_fallthru
          _
        // Predicated region
        $region41: #{tpu_custom_call.1} parent=31 // pred_check
          %p320 = pneg %p111
        $region42: #{tpu_custom_call.1} parent=31 // pred_check_branch
          %322 = sbr.rel (%p320) target = $region44
        $region43: #{tpu_custom_call.1} parent=31 // pred_region
          %s323 = sand.u32 %s23, 1
          %s324 = scalar_lea.sflag [#allocation9], %s323
          %s325 = sand.u32 %s101, 1
          %s326 = smul.addr %s325, 4
          %s327 = scalar_lea.vmem [#allocation10], %s326
          %s329 = ssub.s32 64, 64
          %330 = vsyncadd %s324, %s329
          %s331 = sadd.s32 %s31, %s30
          %s332 = smul.addr %s331, 64
          %s333 = scalar_lea.hbm %s2, %s332
          %s335 = sshll.u32 %s327, 4
          %s336 = int_to_ptr.vmem [resolvable:$true] %s335
          %338 = dma.hbm_to_vmem [thread:$0]  %s333, 64, %s336, %s324
        $region44: #{tpu_custom_call.1} parent=31 // pred_fallthru
          _
      $region32: #{tpu_custom_call.1} parent=5 // pred_fallthru
        _
      %p339 = scmp.le.s32.totalorder 1, %s23
      %p340 = scmp.lt.s32.totalorder %s23, 3
      %p341 = pnand %p339, %p340
      %p342 = pneg %p341
      // Predicated region
      $region45: #{tpu_custom_call.1} parent=5 // pred_check
        _
      $region46: #{tpu_custom_call.1} parent=5 // pred_check_branch
        %344 = sbr.rel (%p341) target = $region48
      $region47: #{tpu_custom_call.1} parent=5 // pred_region
        %s345 = ssub.s32 %s23, 1
        %s346 = sand.u32 %s50, 1
        %s347 = scalar_lea.sflag [#allocation6], %s346
        %s348 = sand.u32 %s50, 1
        %s349 = smul.addr %s348, 8
        %s350 = scalar_lea.vmem [#allocation5], %s349
        // Predicated region
        $region49: #{tpu_custom_call.1} parent=47 // pred_check
          %p351 = pneg %p63
        $region50: #{tpu_custom_call.1} parent=47 // pred_check_branch
          %353 = sbr.rel (%p351) target = $region52
        $region51: #{tpu_custom_call.1} parent=47 // pred_region
          %354 = dma.done %s347, 128
        $region52: #{tpu_custom_call.1} parent=47 // pred_fallthru
          _
        %s355 = sand.u32 %s28, 1
        %s356 = scalar_lea.sflag [#allocation9], %s355
        %s357 = sand.u32 %s76, 1
        %s358 = smul.addr %s357, 8
        %s359 = scalar_lea.vmem [#allocation8], %s358
        // Predicated region
        $region53: #{tpu_custom_call.1} parent=47 // pred_check
          %p360 = pneg %p89
        $region54: #{tpu_custom_call.1} parent=47 // pred_check_branch
          %362 = sbr.rel (%p360) target = $region56
        $region55: #{tpu_custom_call.1} parent=47 // pred_region
          %363 = dma.done %s356, 128
        $region56: #{tpu_custom_call.1} parent=47 // pred_fallthru
          _
        %s364 = sand.u32 %s28, 1
        %s365 = scalar_lea.sflag [#allocation9], %s364
        %s366 = sand.u32 %s104, 1
        %s367 = smul.addr %s366, 4
        %s368 = scalar_lea.vmem [#allocation10], %s367
        // Predicated region
        $region57: #{tpu_custom_call.1} parent=47 // pred_check
          %p369 = pneg %p117
        $region58: #{tpu_custom_call.1} parent=47 // pred_check_branch
          %371 = sbr.rel (%p369) target = $region60
        $region59: #{tpu_custom_call.1} parent=47 // pred_region
          %372 = dma.done %s365, 64
        $region60: #{tpu_custom_call.1} parent=47 // pred_fallthru
          _
        // Predicated region
        $region61: #{tpu_custom_call.1} parent=47 // pred_check
          %p373 = pneg %p159
        $region62: #{tpu_custom_call.1} parent=47 // pred_check_branch
          %375 = sbr.rel (%p373) target = $region64
        $region63: #{tpu_custom_call.1} parent=47 // pred_region
          %376 = dma.done [#allocation12], 256
        $region64: #{tpu_custom_call.1} parent=47 // pred_fallthru
          _
        // Predicated region
        $region65: #{tpu_custom_call.1} parent=47 // pred_check
          %p377 = pneg %p201
        $region66: #{tpu_custom_call.1} parent=47 // pred_check_branch
          %379 = sbr.rel (%p377) target = $region68
        $region67: #{tpu_custom_call.1} parent=47 // pred_region
          %380 = dma.done [#allocation12], 256
        $region68: #{tpu_custom_call.1} parent=47 // pred_fallthru
          _
        %s381 = sand.u32 %s50, 1
        %s382 = scalar_lea.sflag [#allocation6], %s381
        %s383 = sand.u32 %s50, 1
        %s384 = smul.addr %s383, 8
        %s385 = scalar_lea.vmem [#allocation5], %s384
        %p386 = pneg %p63
        %p387 = pneg %p60
        %s388 = sand.u32 %s28, 1
        %s389 = scalar_lea.sflag [#allocation9], %s388
        %s390 = sand.u32 %s76, 1
        %s391 = smul.addr %s390, 8
        %s392 = scalar_lea.vmem [#allocation8], %s391
        %p393 = pneg %p89
        %p394 = pneg %p86
        %s395 = sand.u32 %s28, 1
        %s396 = scalar_lea.sflag [#allocation9], %s395
        %s397 = sand.u32 %s104, 1
        %s398 = smul.addr %s397, 4
        %s399 = scalar_lea.vmem [#allocation10], %s398
        %p400 = pneg %p117
        %p401 = pneg %p114
        %p402 = pneg %p138
        %p403 = pneg %p135
        %p404 = pneg %p159
        %p405 = pneg %p156
        %p406 = pneg %p180
        %p407 = pneg %p177
        %p408 = pneg %p201
        %p409 = pneg %p198
        %p410 = pneg %p229
        %p411 = pneg %p226
        %s412 = sand.u32 %s216, 1
        %s413 = scalar_lea.sflag [#allocation7], %s412
        %s414 = sand.u32 %s216, 1
        %s415 = smul.addr %s414, 8
        %s416 = scalar_lea.vmem [#allocation14], %s415
        %v420 = vld [vmem:[%s350] sm:$0xff]
        %v421 = vld [vmem:[%s359] sm:$0xf]
        %v422 = vld [vmem:[%s359 + $0x4] sm:$0xf]
        %v423 = vld [vmem:[%s368] sm:$0xf]
        %vm424 = vcmp.gt.bf16.partialorder %v423, 0
        %v425 = vld [vmem:[%s3] sm:$0x1]
        %v426 = vmul.f32 %v420, %v420
        %vm427 = vcmask 261120
        %v428 = vsel %vm427, %v426, 0.0
        %429 = vadd.xlane.f32.xlu0 %v428
        %v430 = vpop.xlane.xlu0 %429
        %v431 = vrcp.pop 32.0
        %v432 = vmul.f32 %v430, %v431
        %v433 = vadd.f32 %v432, 1e-05
        %v434 = vrsqrt.pop %v433
        %v435 = vmul.f32 %v420, %v434
        %v437 = vlaneseq
        %v438 = vshrl.u32 %v437, 7
        %v439 = vsub.s32 0, %v438
        %v440 = vrot.slane %v425, %v439
        %v442 = vmul.f32 %v435, %v440
        %v443 = vpack.c.bf16 %v442, %v442
        %v444 = vld [vmem:[#allocation11] sm:$0xf]
        %v445 = vld [vmem:[#allocation11 + $0x4] sm:$0xf]
        %v446 = vld [vmem:[#allocation11 + $0x8] sm:$0xf]
        %v447 = vld [vmem:[#allocation11 + $0xc] sm:$0xf]
        %v452 = vunpack.c.l.b16 %v444
        %v453 = vunpack.c.l.b16 %v445
        %v454 = vunpack.c.l.b16 %v446
        %v455 = vunpack.c.l.b16 %v447
        %v456 = vpack.c.b16 %v453, %v452
        %v457 = vpack.c.b16 %v455, %v454
        %v461 = vsel %vm427, %v443, 0
        %463 = vmatprep.subr.bf16.mxu0 0
        %464 = vmatpush1.bf16.msra.mxu0 %v456
        %465 = vmatprep.subr.bf16.mxu0 0
        %466 = vmatpush1.bf16.msra.mxu0 %v457
        %467 = vmatprep.subr.bf16.mxu0 0
        %468 = vmatpush1.bf16.msra.mxu0 0
        %469 = vmatprep.subr.bf16.mxu0 0
        %470 = vmatpush1.bf16.msra.mxu0 0
        %471 = vmatprep.subr.bf16.mxu0 0
        %472 = vmatpush1.bf16.msra.mxu0 0
        %473 = vmatprep.subr.bf16.mxu0 0
        %474 = vmatpush1.bf16.msra.mxu0 0
        %475 = vmatprep.subr.bf16.mxu0 0
        %476 = vmatpush1.bf16.msra.mxu0 0
        %477 = vmatprep.subr.bf16.mxu0 0
        %478 = vmatpush1.bf16.msra.mxu0 0
        %479 = vmatprep.subr.bf16.mxu0 0
        %480 = vmatpush1.bf16.msra.mxu0 0
        %481 = vmatprep.subr.bf16.mxu0 0
        %482 = vmatpush1.bf16.msra.mxu0 0
        %483 = vmatprep.subr.bf16.mxu0 0
        %484 = vmatpush1.bf16.msra.mxu0 0
        %485 = vmatprep.subr.bf16.mxu0 0
        %486 = vmatpush1.bf16.msra.mxu0 0
        %487 = vmatprep.subr.bf16.mxu0 0
        %488 = vmatpush1.bf16.msra.mxu0 0
        %489 = vmatprep.subr.bf16.mxu0 0
        %490 = vmatpush1.bf16.msra.mxu0 0
        %491 = vmatprep.subr.bf16.mxu0 0
        %492 = vmatpush1.bf16.msra.mxu0 0
        %493 = vmatprep.subr.bf16.mxu0 0
        %494 = vmatpush1.bf16.msra.mxu0 0
        %495 = vmatprep.mubr.bf16.mxu0 0
        %496 = vmatmul.mubr.bf16.gmra.mrb[0].mxu0 %v461
        %v497 = vpop.f32.mrb[0].mxu0
        %v498 = vadd.f32 0.0, %v497
        %v499 = vpop.f32.mrb[0].mxu0
        %v500 = vpop.f32.mrb[0].mxu0
        %v501 = vpop.f32.mrb[0].mxu0
        %502 = vdwg.mxu0
        %v503 = vpack.c.bf16 %v498, %v498
        %vm504 = vcmask 257024
        %505 = vst.msk [vmem:[#allocation2] sm:$0xf] %vm504, %v503
        %v506 = vld [vmem:[%s5] sm:$0xf]
        %v507 = vld [vmem:[%s5 + $0x4] sm:$0xf]
        %v508 = vld [vmem:[%s5 + $0x8] sm:$0xf]
        %v509 = vld [vmem:[%s5 + $0xc] sm:$0xf]
        %v512 = vunpack.c.l.b16 %v421
        %v513 = vunpack.c.l.b16 %v422
        %v514 = vpack.c.b16 %v513, %v512
        %v519 = vunpack.c.l.b16 %v506
        %v520 = vunpack.c.l.b16 %v507
        %v521 = vunpack.c.l.b16 %v508
        %v522 = vunpack.c.l.b16 %v509
        %v523 = vpack.c.b16 %v520, %v519
        %v524 = vpack.c.b16 %v522, %v521
        %v528 = vsel %vm427, %v514, 0
        %530 = vmatprep.subr.bf16.mxu0 0
        %531 = vmatpush1.bf16.msra.mxu0 %v523
        %532 = vmatprep.subr.bf16.mxu0 0
        %533 = vmatpush1.bf16.msra.mxu0 %v524
        %534 = vmatprep.subr.bf16.mxu0 0
        %535 = vmatpush1.bf16.msra.mxu0 0
        %536 = vmatprep.subr.bf16.mxu0 0
        %537 = vmatpush1.bf16.msra.mxu0 0
        %538 = vmatprep.subr.bf16.mxu0 0
        %539 = vmatpush1.bf16.msra.mxu0 0
        %540 = vmatprep.subr.bf16.mxu0 0
        %541 = vmatpush1.bf16.msra.mxu0 0
        %542 = vmatprep.subr.bf16.mxu0 0
        %543 = vmatpush1.bf16.msra.mxu0 0
        %544 = vmatprep.subr.bf16.mxu0 0
        %545 = vmatpush1.bf16.msra.mxu0 0
        %546 = vmatprep.subr.bf16.mxu0 0
        %547 = vmatpush1.bf16.msra.mxu0 0
        %548 = vmatprep.subr.bf16.mxu0 0
        %549 = vmatpush1.bf16.msra.mxu0 0
        %550 = vmatprep.subr.bf16.mxu0 0
        %551 = vmatpush1.bf16.msra.mxu0 0
        %552 = vmatprep.subr.bf16.mxu0 0
        %553 = vmatpush1.bf16.msra.mxu0 0
        %554 = vmatprep.subr.bf16.mxu0 0
        %555 = vmatpush1.bf16.msra.mxu0 0
        %556 = vmatprep.subr.bf16.mxu0 0
        %557 = vmatpush1.bf16.msra.mxu0 0
        %558 = vmatprep.subr.bf16.mxu0 0
        %559 = vmatpush1.bf16.msra.mxu0 0
        %560 = vmatprep.subr.bf16.mxu0 0
        %561 = vmatpush1.bf16.msra.mxu0 0
        %562 = vmatprep.mubr.bf16.mxu0 0
        %563 = vmatmul.mubr.bf16.gmra.mrb[0].mxu0 %v528
        %v564 = vpop.f32.mrb[0].mxu0
        %v565 = vadd.f32 0.0, %v564
        %v566 = vpop.f32.mrb[0].mxu0
        %v567 = vpop.f32.mrb[0].mxu0
        %v568 = vadd.f32 0.0, %v567
        %v569 = vpop.f32.mrb[0].mxu0
        %570 = vdwg.mxu0
        %v571 = vpack.c.bf16 %v568, %v565
        %vm572 = vcmask 523264
        %573 = vst.msk [vmem:[#allocation3] sm:$0xff] %vm572, %v571
        %v574 = vld [vmem:[#allocation2] sm:$0xf]
        %v575 = vld [vmem:[#allocation3] sm:$0xff]
        %vm576 = vcmask 64512
        %v578 = vsel %vm576, %v574, 0
        %v581 = vsel %vm576, %v575, 0
        %583 = vmatprep.subr.bf16.mxu0 0
        %584 = vmatpush1.bf16.xpose.msra.mxu0 %v581
        %585 = vmatprep.subr.bf16.mxu0 0
        %586 = vmatpush1.bf16.xpose.msra.mxu0 0
        %587 = vmatprep.subr.bf16.mxu0 0
        %588 = vmatpush1.bf16.xpose.msra.mxu0 0
        %589 = vmatprep.subr.bf16.mxu0 0
        %590 = vmatpush1.bf16.xpose.msra.mxu0 0
        %591 = vmatprep.subr.bf16.mxu0 0
        %592 = vmatpush1.bf16.xpose.msra.mxu0 0
        %593 = vmatprep.subr.bf16.mxu0 0
        %594 = vmatpush1.bf16.xpose.msra.mxu0 0
        %595 = vmatprep.subr.bf16.mxu0 0
        %596 = vmatpush1.bf16.xpose.msra.mxu0 0
        %597 = vmatprep.subr.bf16.mxu0 0
        %598 = vmatpush1.bf16.xpose.msra.mxu0 0
        %599 = vmatprep.subr.bf16.mxu0 0
        %600 = vmatpush1.bf16.xpose.msra.mxu0 0
        %601 = vmatprep.subr.bf16.mxu0 0
        %602 = vmatpush1.bf16.xpose.msra.mxu0 0
        %603 = vmatprep.subr.bf16.mxu0 0
        %604 = vmatpush1.bf16.xpose.msra.mxu0 0
        %605 = vmatprep.subr.bf16.mxu0 0
        %606 = vmatpush1.bf16.xpose.msra.mxu0 0
        %607 = vmatprep.subr.bf16.mxu0 0
        %608 = vmatpush1.bf16.xpose.msra.mxu0 0
        %609 = vmatprep.subr.bf16.mxu0 0
        %610 = vmatpush1.bf16.xpose.msra.mxu0 0
        %611 = vmatprep.subr.bf16.mxu0 0
        %612 = vmatpush1.bf16.xpose.msra.mxu0 0
        %613 = vmatprep.subr.bf16.mxu0 0
        %614 = vmatpush1.bf16.xpose.msra.mxu0 0
        %615 = vmatprep.mubr.bf16.mxu0 0
        %616 = vmatmul.mubr.bf16.gmra.mrb[0].mxu0 %v578
        %v617 = vpop.f32.mrb[0].mxu0
        %v618 = vadd.f32 0.0, %v617
        %v619 = vpop.f32.mrb[0].mxu0
        %v620 = vpop.f32.mrb[0].mxu0
        %v621 = vpop.f32.mrb[0].mxu0
        %622 = vdwg.mxu0
        %v623 = vsel %vm424, 65537, 0
        %v624 = vunpack.c.l.b16 %v623
        %vm625 = vcmp.ne.s32.totalorder %v624, 0
        %v626 = vsel %vm625, %v618, -1e+30
        %vm627 = vcmask 130048
        %v628 = vsel %vm627, %v626, -inf
        %629 = vmax.xlane.f32.xlu0 %v628
        %v630 = vpop.xlane.xlu0 %629
        %v631 = vsub.f32 %v626, %v630
        %v632 = vmul.f32 %v631, 1.442695
        %v633 = vpow.pop %v632
        %v634 = vsel %vm627, %v633, 0.0
        %635 = vadd.xlane.f32.xlu0 %v634
        %v636 = vpop.xlane.xlu0 %635
        %v637 = vrcp.pop %v636
        %v638 = vmul.f32 %v633, %v637
        %v639 = vsel %vm625, %v638, 0.0
        %v640 = vpack.c.bf16 %v639, %v639
        %642 = vrot.lane.b32.xlu0 %v575, 96
        %v643 = vpop.permute.xlu0 %642
        %v646 = vsel %vm627, %v640, 0
        %648 = vmatprep.subr.bf16.mxu0 0
        %649 = vmatpush1.bf16.msra.mxu0 %v643
        %650 = vmatprep.subr.bf16.mxu0 0
        %651 = vmatpush1.bf16.msra.mxu0 0
        %652 = vmatprep.subr.bf16.mxu0 0
        %653 = vmatpush1.bf16.msra.mxu0 0
        %654 = vmatprep.subr.bf16.mxu0 0
        %655 = vmatpush1.bf16.msra.mxu0 0
        %656 = vmatprep.subr.bf16.mxu0 0
        %657 = vmatpush1.bf16.msra.mxu0 0
        %658 = vmatprep.subr.bf16.mxu0 0
        %659 = vmatpush1.bf16.msra.mxu0 0
        %660 = vmatprep.subr.bf16.mxu0 0
        %661 = vmatpush1.bf16.msra.mxu0 0
        %662 = vmatprep.subr.bf16.mxu0 0
        %663 = vmatpush1.bf16.msra.mxu0 0
        %664 = vmatprep.subr.bf16.mxu0 0
        %665 = vmatpush1.bf16.msra.mxu0 0
        %666 = vmatprep.subr.bf16.mxu0 0
        %667 = vmatpush1.bf16.msra.mxu0 0
        %668 = vmatprep.subr.bf16.mxu0 0
        %669 = vmatpush1.bf16.msra.mxu0 0
        %670 = vmatprep.subr.bf16.mxu0 0
        %671 = vmatpush1.bf16.msra.mxu0 0
        %672 = vmatprep.subr.bf16.mxu0 0
        %673 = vmatpush1.bf16.msra.mxu0 0
        %674 = vmatprep.subr.bf16.mxu0 0
        %675 = vmatpush1.bf16.msra.mxu0 0
        %676 = vmatprep.subr.bf16.mxu0 0
        %677 = vmatpush1.bf16.msra.mxu0 0
        %678 = vmatprep.subr.bf16.mxu0 0
        %679 = vmatpush1.bf16.msra.mxu0 0
        %680 = vmatprep.mubr.bf16.mxu0 0
        %681 = vmatmul.mubr.bf16.gmra.mrb[0].mxu0 %v646
        %v682 = vpop.f32.mrb[0].mxu0
        %v683 = vadd.f32 0.0, %v682
        %v684 = vpop.f32.mrb[0].mxu0
        %v685 = vpop.f32.mrb[0].mxu0
        %v686 = vpop.f32.mrb[0].mxu0
        %687 = vdwg.mxu0
        %688 = vst.msk [vmem:[#allocation4] sm:$0xff] %vm576, %v683
        %v689 = vld [vmem:[#allocation2] sm:$0xf]
        %v690 = vld [vmem:[#allocation3] sm:$0xff]
        %v692 = vunpack.c.l.b16 %v689
        %v693 = vpack.c.b16 %v692, %v692
        %694 = vrot.lane.b32.xlu0 %v693, 120
        %v695 = vpop.permute.xlu0 %694
        %697 = vrot.lane.b32.xlu0 %v690, 120
        %v698 = vpop.permute.xlu0 %697
        %v700 = vsel %vm576, %v695, 0
        %v703 = vsel %vm576, %v698, 0
        %705 = vmatprep.subr.bf16.mxu0 0
        %706 = vmatpush1.bf16.xpose.msra.mxu0 %v703
        %707 = vmatprep.subr.bf16.mxu0 0
        %708 = vmatpush1.bf16.xpose.msra.mxu0 0
        %709 = vmatprep.subr.bf16.mxu0 0
        %710 = vmatpush1.bf16.xpose.msra.mxu0 0
        %711 = vmatprep.subr.bf16.mxu0 0
        %712 = vmatpush1.bf16.xpose.msra.mxu0 0
        %713 = vmatprep.subr.bf16.mxu0 0
        %714 = vmatpush1.bf16.xpose.msra.mxu0 0
        %715 = vmatprep.subr.bf16.mxu0 0
        %716 = vmatpush1.bf16.xpose.msra.mxu0 0
        %717 = vmatprep.subr.bf16.mxu0 0
        %718 = vmatpush1.bf16.xpose.msra.mxu0 0
        %719 = vmatprep.subr.bf16.mxu0 0
        %720 = vmatpush1.bf16.xpose.msra.mxu0 0
        %721 = vmatprep.subr.bf16.mxu0 0
        %722 = vmatpush1.bf16.xpose.msra.mxu0 0
        %723 = vmatprep.subr.bf16.mxu0 0
        %724 = vmatpush1.bf16.xpose.msra.mxu0 0
        %725 = vmatprep.subr.bf16.mxu0 0
        %726 = vmatpush1.bf16.xpose.msra.mxu0 0
        %727 = vmatprep.subr.bf16.mxu0 0
        %728 = vmatpush1.bf16.xpose.msra.mxu0 0
        %729 = vmatprep.subr.bf16.mxu0 0
        %730 = vmatpush1.bf16.xpose.msra.mxu0 0
        %731 = vmatprep.subr.bf16.mxu0 0
        %732 = vmatpush1.bf16.xpose.msra.mxu0 0
        %733 = vmatprep.subr.bf16.mxu0 0
        %734 = vmatpush1.bf16.xpose.msra.mxu0 0
        %735 = vmatprep.subr.bf16.mxu0 0
        %736 = vmatpush1.bf16.xpose.msra.mxu0 0
        %737 = vmatprep.mubr.bf16.mxu0 0
        %738 = vmatmul.mubr.bf16.gmra.mrb[0].mxu0 %v700
        %v739 = vpop.f32.mrb[0].mxu0
        %v740 = vadd.f32 0.0, %v739
        %v741 = vpop.f32.mrb[0].mxu0
        %v742 = vpop.f32.mrb[0].mxu0
        %v743 = vpop.f32.mrb[0].mxu0
        %744 = vdwg.mxu0
        %v745 = vsel %vm625, %v740, -1e+30
        %v746 = vsel %vm627, %v745, -inf
        %747 = vmax.xlane.f32.xlu0 %v746
        %v748 = vpop.xlane.xlu0 %747
        %v749 = vsub.f32 %v745, %v748
        %v750 = vmul.f32 %v749, 1.442695
        %v751 = vpow.pop %v750
        %v752 = vsel %vm627, %v751, 0.0
        %753 = vadd.xlane.f32.xlu0 %v752
        %v754 = vpop.xlane.xlu0 %753
        %v755 = vrcp.pop %v754
        %v756 = vmul.f32 %v751, %v755
        %v757 = vsel %vm625, %v756, 0.0
        %v758 = vpack.c.bf16 %v757, %v757
        %759 = vrot.lane.b32.xlu0 %v690, 88
        %v760 = vpop.permute.xlu0 %759
        %v763 = vsel %vm627, %v758, 0
        %765 = vmatprep.subr.bf16.mxu0 0
        %766 = vmatpush1.bf16.msra.mxu0 %v760
        %767 = vmatprep.subr.bf16.mxu0 0
        %768 = vmatpush1.bf16.msra.mxu0 0
        %769 = vmatprep.subr.bf16.mxu0 0
        %770 = vmatpush1.bf16.msra.mxu0 0
        %771 = vmatprep.subr.bf16.mxu0 0
        %772 = vmatpush1.bf16.msra.mxu0 0
        %773 = vmatprep.subr.bf16.mxu0 0
        %774 = vmatpush1.bf16.msra.mxu0 0
        %775 = vmatprep.subr.bf16.mxu0 0
        %776 = vmatpush1.bf16.msra.mxu0 0
        %777 = vmatprep.subr.bf16.mxu0 0
        %778 = vmatpush1.bf16.msra.mxu0 0
        %779 = vmatprep.subr.bf16.mxu0 0
        %780 = vmatpush1.bf16.msra.mxu0 0
        %781 = vmatprep.subr.bf16.mxu0 0
        %782 = vmatpush1.bf16.msra.mxu0 0
        %783 = vmatprep.subr.bf16.mxu0 0
        %784 = vmatpush1.bf16.msra.mxu0 0
        %785 = vmatprep.subr.bf16.mxu0 0
        %786 = vmatpush1.bf16.msra.mxu0 0
        %787 = vmatprep.subr.bf16.mxu0 0
        %788 = vmatpush1.bf16.msra.mxu0 0
        %789 = vmatprep.subr.bf16.mxu0 0
        %790 = vmatpush1.bf16.msra.mxu0 0
        %791 = vmatprep.subr.bf16.mxu0 0
        %792 = vmatpush1.bf16.msra.mxu0 0
        %793 = vmatprep.subr.bf16.mxu0 0
        %794 = vmatpush1.bf16.msra.mxu0 0
        %795 = vmatprep.subr.bf16.mxu0 0
        %796 = vmatpush1.bf16.msra.mxu0 0
        %797 = vmatprep.mubr.bf16.mxu0 0
        %798 = vmatmul.mubr.bf16.gmra.mrb[0].mxu0 %v763
        %v799 = vpop.f32.mrb[0].mxu0
        %v800 = vadd.f32 0.0, %v799
        %v801 = vpop.f32.mrb[0].mxu0
        %v802 = vpop.f32.mrb[0].mxu0
        %v803 = vpop.f32.mrb[0].mxu0
        %804 = vdwg.mxu0
        %806 = vrot.lane.b32.xlu0 %v800, 8
        %v807 = vpop.permute.xlu0 %806
        %vm809 = vcmask 130112
        %810 = vst.msk [vmem:[#allocation4] sm:$0xff] %vm809, %v807
        %v811 = vld [vmem:[#allocation2] sm:$0xf]
        %v812 = vld [vmem:[#allocation3] sm:$0xff]
        %v814 = vunpack.c.l.b16 %v811
        %v815 = vpack.c.b16 %v814, %v814
        %816 = vrot.lane.b32.xlu0 %v815, 112
        %v817 = vpop.permute.xlu0 %816
        %819 = vrot.lane.b32.xlu0 %v812, 112
        %v820 = vpop.permute.xlu0 %819
        %v822 = vsel %vm576, %v817, 0
        %v825 = vsel %vm576, %v820, 0
        %827 = vmatprep.subr.bf16.mxu0 0
        %828 = vmatpush1.bf16.xpose.msra.mxu0 %v825
        %829 = vmatprep.subr.bf16.mxu0 0
        %830 = vmatpush1.bf16.xpose.msra.mxu0 0
        %831 = vmatprep.subr.bf16.mxu0 0
        %832 = vmatpush1.bf16.xpose.msra.mxu0 0
        %833 = vmatprep.subr.bf16.mxu0 0
        %834 = vmatpush1.bf16.xpose.msra.mxu0 0
        %835 = vmatprep.subr.bf16.mxu0 0
        %836 = vmatpush1.bf16.xpose.msra.mxu0 0
        %837 = vmatprep.subr.bf16.mxu0 0
        %838 = vmatpush1.bf16.xpose.msra.mxu0 0
        %839 = vmatprep.subr.bf16.mxu0 0
        %840 = vmatpush1.bf16.xpose.msra.mxu0 0
        %841 = vmatprep.subr.bf16.mxu0 0
        %842 = vmatpush1.bf16.xpose.msra.mxu0 0
        %843 = vmatprep.subr.bf16.mxu0 0
        %844 = vmatpush1.bf16.xpose.msra.mxu0 0
        %845 = vmatprep.subr.bf16.mxu0 0
        %846 = vmatpush1.bf16.xpose.msra.mxu0 0
        %847 = vmatprep.subr.bf16.mxu0 0
        %848 = vmatpush1.bf16.xpose.msra.mxu0 0
        %849 = vmatprep.subr.bf16.mxu0 0
        %850 = vmatpush1.bf16.xpose.msra.mxu0 0
        %851 = vmatprep.subr.bf16.mxu0 0
        %852 = vmatpush1.bf16.xpose.msra.mxu0 0
        %853 = vmatprep.subr.bf16.mxu0 0
        %854 = vmatpush1.bf16.xpose.msra.mxu0 0
        %855 = vmatprep.subr.bf16.mxu0 0
        %856 = vmatpush1.bf16.xpose.msra.mxu0 0
        %857 = vmatprep.subr.bf16.mxu0 0
        %858 = vmatpush1.bf16.xpose.msra.mxu0 0
        %859 = vmatprep.mubr.bf16.mxu0 0
        %860 = vmatmul.mubr.bf16.gmra.mrb[0].mxu0 %v822
        %v861 = vpop.f32.mrb[0].mxu0
        %v862 = vadd.f32 0.0, %v861
        %v863 = vpop.f32.mrb[0].mxu0
        %v864 = vpop.f32.mrb[0].mxu0
        %v865 = vpop.f32.mrb[0].mxu0
        %866 = vdwg.mxu0
        %v867 = vsel %vm625, %v862, -1e+30
        %v868 = vsel %vm627, %v867, -inf
        %869 = vmax.xlane.f32.xlu0 %v868
        %v870 = vpop.xlane.xlu0 %869
        %v871 = vsub.f32 %v867, %v870
        %v872 = vmul.f32 %v871, 1.442695
        %v873 = vpow.pop %v872
        %v874 = vsel %vm627, %v873, 0.0
        %875 = vadd.xlane.f32.xlu0 %v874
        %v876 = vpop.xlane.xlu0 %875
        %v877 = vrcp.pop %v876
        %v878 = vmul.f32 %v873, %v877
        %v879 = vsel %vm625, %v878, 0.0
        %v880 = vpack.c.bf16 %v879, %v879
        %881 = vrot.lane.b32.xlu0 %v812, 80
        %v882 = vpop.permute.xlu0 %881
        %v885 = vsel %vm627, %v880, 0
        %887 = vmatprep.subr.bf16.mxu0 0
        %888 = vmatpush1.bf16.msra.mxu0 %v882
        %889 = vmatprep.subr.bf16.mxu0 0
        %890 = vmatpush1.bf16.msra.mxu0 0
        %891 = vmatprep.subr.bf16.mxu0 0
        %892 = vmatpush1.bf16.msra.mxu0 0
        %893 = vmatprep.subr.bf16.mxu0 0
        %894 = vmatpush1.bf16.msra.mxu0 0
        %895 = vmatprep.subr.bf16.mxu0 0
        %896 = vmatpush1.bf16.msra.mxu0 0
        %897 = vmatprep.subr.bf16.mxu0 0
        %898 = vmatpush1.bf16.msra.mxu0 0
        %899 = vmatprep.subr.bf16.mxu0 0
        %900 = vmatpush1.bf16.msra.mxu0 0
        %901 = vmatprep.subr.bf16.mxu0 0
        %902 = vmatpush1.bf16.msra.mxu0 0
        %903 = vmatprep.subr.bf16.mxu0 0
        %904 = vmatpush1.bf16.msra.mxu0 0
        %905 = vmatprep.subr.bf16.mxu0 0
        %906 = vmatpush1.bf16.msra.mxu0 0
        %907 = vmatprep.subr.bf16.mxu0 0
        %908 = vmatpush1.bf16.msra.mxu0 0
        %909 = vmatprep.subr.bf16.mxu0 0
        %910 = vmatpush1.bf16.msra.mxu0 0
        %911 = vmatprep.subr.bf16.mxu0 0
        %912 = vmatpush1.bf16.msra.mxu0 0
        %913 = vmatprep.subr.bf16.mxu0 0
        %914 = vmatpush1.bf16.msra.mxu0 0
        %915 = vmatprep.subr.bf16.mxu0 0
        %916 = vmatpush1.bf16.msra.mxu0 0
        %917 = vmatprep.subr.bf16.mxu0 0
        %918 = vmatpush1.bf16.msra.mxu0 0
        %919 = vmatprep.mubr.bf16.mxu0 0
        %920 = vmatmul.mubr.bf16.gmra.mrb[0].mxu0 %v885
        %v921 = vpop.f32.mrb[0].mxu0
        %v922 = vadd.f32 0.0, %v921
        %v923 = vpop.f32.mrb[0].mxu0
        %v924 = vpop.f32.mrb[0].mxu0
        %v925 = vpop.f32.mrb[0].mxu0
        %926 = vdwg.mxu0
        %928 = vrot.lane.b32.xlu0 %v922, 16
        %v929 = vpop.permute.xlu0 %928
        %vm931 = vcmask 195712
        %932 = vst.msk [vmem:[#allocation4] sm:$0xff] %vm931, %v929
        %v933 = vld [vmem:[#allocation2] sm:$0xf]
        %v934 = vld [vmem:[#allocation3] sm:$0xff]
        %v936 = vunpack.c.l.b16 %v933
        %v937 = vpack.c.b16 %v936, %v936
        %938 = vrot.lane.b32.xlu0 %v937, 104
        %v939 = vpop.permute.xlu0 %938
        %941 = vrot.lane.b32.xlu0 %v934, 104
        %v942 = vpop.permute.xlu0 %941
        %v944 = vsel %vm576, %v939, 0
        %v947 = vsel %vm576, %v942, 0
        %949 = vmatprep.subr.bf16.mxu0 0
        %950 = vmatpush1.bf16.xpose.msra.mxu0 %v947
        %951 = vmatprep.subr.bf16.mxu0 0
        %952 = vmatpush1.bf16.xpose.msra.mxu0 0
        %953 = vmatprep.subr.bf16.mxu0 0
        %954 = vmatpush1.bf16.xpose.msra.mxu0 0
        %955 = vmatprep.subr.bf16.mxu0 0
        %956 = vmatpush1.bf16.xpose.msra.mxu0 0
        %957 = vmatprep.subr.bf16.mxu0 0
        %958 = vmatpush1.bf16.xpose.msra.mxu0 0
        %959 = vmatprep.subr.bf16.mxu0 0
        %960 = vmatpush1.bf16.xpose.msra.mxu0 0
        %961 = vmatprep.subr.bf16.mxu0 0
        %962 = vmatpush1.bf16.xpose.msra.mxu0 0
        %963 = vmatprep.subr.bf16.mxu0 0
        %964 = vmatpush1.bf16.xpose.msra.mxu0 0
        %965 = vmatprep.subr.bf16.mxu0 0
        %966 = vmatpush1.bf16.xpose.msra.mxu0 0
        %967 = vmatprep.subr.bf16.mxu0 0
        %968 = vmatpush1.bf16.xpose.msra.mxu0 0
        %969 = vmatprep.subr.bf16.mxu0 0
        %970 = vmatpush1.bf16.xpose.msra.mxu0 0
        %971 = vmatprep.subr.bf16.mxu0 0
        %972 = vmatpush1.bf16.xpose.msra.mxu0 0
        %973 = vmatprep.subr.bf16.mxu0 0
        %974 = vmatpush1.bf16.xpose.msra.mxu0 0
        %975 = vmatprep.subr.bf16.mxu0 0
        %976 = vmatpush1.bf16.xpose.msra.mxu0 0
        %977 = vmatprep.subr.bf16.mxu0 0
        %978 = vmatpush1.bf16.xpose.msra.mxu0 0
        %979 = vmatprep.subr.bf16.mxu0 0
        %980 = vmatpush1.bf16.xpose.msra.mxu0 0
        %981 = vmatprep.mubr.bf16.mxu0 0
        %982 = vmatmul.mubr.bf16.gmra.mrb[0].mxu0 %v944
        %v983 = vpop.f32.mrb[0].mxu0
        %v984 = vadd.f32 0.0, %v983
        %v985 = vpop.f32.mrb[0].mxu0
        %v986 = vpop.f32.mrb[0].mxu0
        %v987 = vpop.f32.mrb[0].mxu0
        %988 = vdwg.mxu0
        %v989 = vsel %vm625, %v984, -1e+30
        %v990 = vsel %vm627, %v989, -inf
        %991 = vmax.xlane.f32.xlu0 %v990
        %v992 = vpop.xlane.xlu0 %991
        %v993 = vsub.f32 %v989, %v992
        %v994 = vmul.f32 %v993, 1.442695
        %v995 = vpow.pop %v994
        %v996 = vsel %vm627, %v995, 0.0
        %997 = vadd.xlane.f32.xlu0 %v996
        %v998 = vpop.xlane.xlu0 %997
        %v999 = vrcp.pop %v998
        %v1000 = vmul.f32 %v995, %v999
        %v1001 = vsel %vm625, %v1000, 0.0
        %v1002 = vpack.c.bf16 %v1001, %v1001
        %1003 = vrot.lane.b32.xlu0 %v934, 72
        %v1004 = vpop.permute.xlu0 %1003
        %v1007 = vsel %vm627, %v1002, 0
        %1009 = vmatprep.subr.bf16.mxu0 0
        %1010 = vmatpush1.bf16.msra.mxu0 %v1004
        %1011 = vmatprep.subr.bf16.mxu0 0
        %1012 = vmatpush1.bf16.msra.mxu0 0
        %1013 = vmatprep.subr.bf16.mxu0 0
        %1014 = vmatpush1.bf16.msra.mxu0 0
        %1015 = vmatprep.subr.bf16.mxu0 0
        %1016 = vmatpush1.bf16.msra.mxu0 0
        %1017 = vmatprep.subr.bf16.mxu0 0
        %1018 = vmatpush1.bf16.msra.mxu0 0
        %1019 = vmatprep.subr.bf16.mxu0 0
        %1020 = vmatpush1.bf16.msra.mxu0 0
        %1021 = vmatprep.subr.bf16.mxu0 0
        %1022 = vmatpush1.bf16.msra.mxu0 0
        %1023 = vmatprep.subr.bf16.mxu0 0
        %1024 = vmatpush1.bf16.msra.mxu0 0
        %1025 = vmatprep.subr.bf16.mxu0 0
        %1026 = vmatpush1.bf16.msra.mxu0 0
        %1027 = vmatprep.subr.bf16.mxu0 0
        %1028 = vmatpush1.bf16.msra.mxu0 0
        %1029 = vmatprep.subr.bf16.mxu0 0
        %1030 = vmatpush1.bf16.msra.mxu0 0
        %1031 = vmatprep.subr.bf16.mxu0 0
        %1032 = vmatpush1.bf16.msra.mxu0 0
        %1033 = vmatprep.subr.bf16.mxu0 0
        %1034 = vmatpush1.bf16.msra.mxu0 0
        %1035 = vmatprep.subr.bf16.mxu0 0
        %1036 = vmatpush1.bf16.msra.mxu0 0
        %1037 = vmatprep.subr.bf16.mxu0 0
        %1038 = vmatpush1.bf16.msra.mxu0 0
        %1039 = vmatprep.subr.bf16.mxu0 0
        %1040 = vmatpush1.bf16.msra.mxu0 0
        %1041 = vmatprep.mubr.bf16.mxu0 0
        %1042 = vmatmul.mubr.bf16.gmra.mrb[0].mxu0 %v1007
        %v1043 = vpop.f32.mrb[0].mxu0
        %v1044 = vadd.f32 0.0, %v1043
        %v1045 = vpop.f32.mrb[0].mxu0
        %v1046 = vpop.f32.mrb[0].mxu0
        %v1047 = vpop.f32.mrb[0].mxu0
        %1048 = vdwg.mxu0
        %1050 = vrot.lane.b32.xlu0 %v1044, 24
        %v1051 = vpop.permute.xlu0 %1050
        %vm1053 = vcmask 261312
        %1054 = vst.msk [vmem:[#allocation4] sm:$0xff] %vm1053, %v1051
        %v1055 = vld [vmem:[#allocation4] sm:$0xff]
        %v1056 = vpack.c.bf16 %v1055, %v1055
        %v1057 = vld [vmem:[#allocation13] sm:$0xf]
        %v1058 = vld [vmem:[#allocation13 + $0x4] sm:$0xf]
        %v1059 = vld [vmem:[#allocation13 + $0x8] sm:$0xf]
        %v1060 = vld [vmem:[#allocation13 + $0xc] sm:$0xf]
        %v1065 = vunpack.c.l.b16 %v1057
        %v1066 = vunpack.c.l.b16 %v1058
        %v1067 = vunpack.c.l.b16 %v1059
        %v1068 = vunpack.c.l.b16 %v1060
        %v1069 = vpack.c.b16 %v1066, %v1065
        %v1070 = vpack.c.b16 %v1068, %v1067
        %v1074 = vsel %vm427, %v1056, 0
        %1076 = vmatprep.subr.bf16.mxu0 0
        %1077 = vmatpush1.bf16.msra.mxu0 %v1069
        %1078 = vmatprep.subr.bf16.mxu0 0
        %1079 = vmatpush1.bf16.msra.mxu0 %v1070
        %1080 = vmatprep.subr.bf16.mxu0 0
        %1081 = vmatpush1.bf16.msra.mxu0 0
        %1082 = vmatprep.subr.bf16.mxu0 0
        %1083 = vmatpush1.bf16.msra.mxu0 0
        %1084 = vmatprep.subr.bf16.mxu0 0
        %1085 = vmatpush1.bf16.msra.mxu0 0
        %1086 = vmatprep.subr.bf16.mxu0 0
        %1087 = vmatpush1.bf16.msra.mxu0 0
        %1088 = vmatprep.subr.bf16.mxu0 0
        %1089 = vmatpush1.bf16.msra.mxu0 0
        %1090 = vmatprep.subr.bf16.mxu0 0
        %1091 = vmatpush1.bf16.msra.mxu0 0
        %1092 = vmatprep.subr.bf16.mxu0 0
        %1093 = vmatpush1.bf16.msra.mxu0 0
        %1094 = vmatprep.subr.bf16.mxu0 0
        %1095 = vmatpush1.bf16.msra.mxu0 0
        %1096 = vmatprep.subr.bf16.mxu0 0
        %1097 = vmatpush1.bf16.msra.mxu0 0
        %1098 = vmatprep.subr.bf16.mxu0 0
        %1099 = vmatpush1.bf16.msra.mxu0 0
        %1100 = vmatprep.subr.bf16.mxu0 0
        %1101 = vmatpush1.bf16.msra.mxu0 0
        %1102 = vmatprep.subr.bf16.mxu0 0
        %1103 = vmatpush1.bf16.msra.mxu0 0
        %1104 = vmatprep.subr.bf16.mxu0 0
        %1105 = vmatpush1.bf16.msra.mxu0 0
        %1106 = vmatprep.subr.bf16.mxu0 0
        %1107 = vmatpush1.bf16.msra.mxu0 0
        %1108 = vmatprep.mubr.bf16.mxu0 0
        %1109 = vmatmul.mubr.bf16.gmra.mrb[0].mxu0 %v1074
        %v1110 = vpop.f32.mrb[0].mxu0
        %v1111 = vadd.f32 0.0, %v1110
        %v1112 = vpop.f32.mrb[0].mxu0
        %v1113 = vpop.f32.mrb[0].mxu0
        %v1114 = vpop.f32.mrb[0].mxu0
        %1115 = vdwg.mxu0
        %v1116 = vadd.f32 %v420, %v1111
        %1117 = vst.msk [vmem:[%s416] sm:$0xff] %vm427, %v1116
        %s1118 = sand.u32 %s216, 1
        %s1119 = scalar_lea.sflag [#allocation7], %s1118
        %s1120 = sand.u32 %s216, 1
        %s1121 = smul.addr %s1120, 8
        %s1122 = scalar_lea.vmem [#allocation14], %s1121
        // Predicated region
        $region69: #{tpu_custom_call.1} parent=47 // pred_check
          %p1123 = pneg %p226
        $region70: #{tpu_custom_call.1} parent=47 // pred_check_branch
          %1125 = sbr.rel (%p1123) target = $region72
        $region71: #{tpu_custom_call.1} parent=47 // pred_region
          %s1127 = ssub.s32 128, 128
          %1128 = vsyncadd %s1119, %s1127
          %s1129 = sadd.s32 %s33, %s32
          %s1130 = smul.addr %s1129, 128
          %s1131 = scalar_lea.hbm %s7, %s1130
          %s1133 = sshll.u32 %s1122, 4
          %s1134 = int_to_ptr.vmem [resolvable:$true] %s1133
          %1136 = dma.vmem_to_hbm [thread:$0]  %s1134, 128, %s1131, %s1119
        $region72: #{tpu_custom_call.1} parent=47 // pred_fallthru
          _
      $region48: #{tpu_custom_call.1} parent=5 // pred_fallthru
        _
      %p1137 = scmp.le.s32.totalorder 2, %s23
      // Predicated region
      $region73: #{tpu_custom_call.1} parent=5 // pred_check
        %p1138 = pneg %p1137
      $region74: #{tpu_custom_call.1} parent=5 // pred_check_branch
        %1140 = sbr.rel (%p1138) target = $region76
      $region75: #{tpu_custom_call.1} parent=5 // pred_region
        %s1141 = ssub.s32 %s23, 2
        // Predicated region
        $region77: #{tpu_custom_call.1} parent=75 // pred_check
          %p1142 = pneg %p232
        $region78: #{tpu_custom_call.1} parent=75 // pred_check_branch
          %1144 = sbr.rel (%p1142) target = $region80
        $region79: #{tpu_custom_call.1} parent=75 // pred_region
          %s1145 = sand.u32 %s217, 1
          %s1146 = scalar_lea.sflag [#allocation7], %s1145
          %s1147 = sand.u32 %s217, 1
          %s1148 = smul.addr %s1147, 8
          %s1149 = scalar_lea.vmem [#allocation14], %s1148
          %1150 = dma.done %s1146, 128
        $region80: #{tpu_custom_call.1} parent=75 // pred_fallthru
          _
      $region76: #{tpu_custom_call.1} parent=5 // pred_fallthru
        _
    $region6: #{tpu_custom_call.1} parent=1 // loop_footer
      %s27 = sadd.s32 1, %s23
    $region7: #{tpu_custom_call.1} parent=1 // loop_footer_branch
      %22 = sbr.rel target = $region3
    $region8: #{tpu_custom_call.1} parent=1 // loop_exit
      _
    %1151 = vsyncpa [#allocation6], 1
    %s1152 = scalar_lea.sflag [#allocation6], 1
    %1153 = vsyncpa %s1152, 1
    %1154 = vsyncpa [#allocation9], 1
    %s1155 = scalar_lea.sflag [#allocation9], 1
    %1156 = vsyncpa %s1155, 1
    %1157 = vsyncpa [#allocation12], 1
    %1158 = vsyncpa [#allocation7], 1
    %s1159 = scalar_lea.sflag [#allocation7], 1
    %1160 = vsyncpa %s1159, 1

</llo_original>
